<compile_context>
chip_gen: v7x
topology: tpu7x:2x2x1
jax: 0.10.0
libtpu: 0.0.40
codegen_flags: <defaults>
</compile_context>

<pallas_src>
import functools

import jax
import jax.numpy as jnp
from jax.experimental import pallas as pl
from jax.experimental.pallas import tpu as pltpu


def _round_up(x, m):
    return (x + m - 1) // m * m


# ----------------------------------------------------------------------------
# Fused Pallas kernel
#   grid axis 0 : layer head   ("parallel",  independent parameters)
#   grid axis 1 : dst-node tile ("arbitrary", VMEM scratch carries the
#                 source-side projections across the dst tiles of one head)
# ----------------------------------------------------------------------------
def _mhat_fused_kernel(m_sim_ref, d_sim_ref, adj_ref,
                       yl_col_ref, yl_row_ref, yr_col_ref, thr_ref,
                       wm_ref, wd_ref, al_ref, ar_ref,
                       out_ref, hm_scr, elt_scr,
                       *, num_heads, out_feats, slope, out_width, mxu_dtype):
    H, F = num_heads, out_feats
    zero = jnp.float32(0.0)
    neg_big = jnp.float32(-1e30)

    # ---- source-side work: once per layer head (first destination tile) -------
    @pl.when(pl.program_id(1) == 0)
    def _():
        gate_l = jax.nn.sigmoid(yl_col_ref[0])                        # [Ns, 1]  (EUP)
        m_feat = (gate_l * m_sim_ref[...]).astype(mxu_dtype)          # [Ns, Fm]
        h_m = jnp.dot(m_feat, wm_ref[0],
                      preferred_element_type=jnp.float32)             # [Ns, HF] (MXU)
        hm_scr[...] = h_m
        # All-head source logits directly in row form [H, Ns]:
        #   el_t = attn_l_blockdiag @ h_m^T  (trans_b matmul; no transpose op)
        elt_scr[...] = jax.lax.dot_general(
            al_ref[0], h_m, (((1,), (1,)), ((), ())),
            preferred_element_type=jnp.float32)                       # [H, Ns]

    # ---- destination-tile work -------------------------------------------------
    gate_r = jax.nn.sigmoid(yr_col_ref[0])                            # [T, 1]
    d_feat = (gate_r * d_sim_ref[...]).astype(mxu_dtype)              # [T, Fd]
    h_d = jnp.dot(d_feat, wd_ref[0],
                  preferred_element_type=jnp.float32)                 # [T, HF]  (MXU)
    er = jax.lax.dot_general(h_d, ar_ref[0], (((1,), (1,)), ((), ())),
                             preferred_element_type=jnp.float32)      # [T, H]

    # Top-k in-edge mask rebuilt from adjacency + per-destination k-th threshold.
    # Additive -inf form, hoisted out of the head loop.  Self-loops guarantee every
    # destination row keeps >= 1 edge, so the row max of `e` is finite, masked
    # exp() underflows to exactly 0 and the softmax denominator is >= 1.
    keep = jnp.logical_and(adj_ref[...] > 0, yl_row_ref[0] >= thr_ref[0])  # [T, Ns]
    mask_add = jnp.where(keep, zero, neg_big)

    h_m = hm_scr[...]                                                 # [Ns, HF]
    el_t = elt_scr[...]                                               # [H, Ns]

    t = d_sim_ref.shape[0]
    out_ref[...] = jnp.zeros((t, out_width), jnp.float32)             # lane-dense block

    for h in range(H):                                                # small static unroll
        # e[i, j] = leaky_relu(el[src j] + er[dst i]) on kept edges
        e = er[:, h:h + 1] + el_t[h:h + 1, :]                         # [T, Ns]
        e = jnp.where(e >= 0, e, slope * e)
        e = e + mask_add
        e = e - jnp.max(e, axis=1, keepdims=True)
        p = jnp.exp(e)                                                # 0 on masked edges
        denom = jnp.sum(p, axis=1, keepdims=True)                     # [T, 1]  (>= 1)
        agg = jnp.dot(p.astype(mxu_dtype),
                      h_m[:, h * F:(h + 1) * F].astype(mxu_dtype),
                      preferred_element_type=jnp.float32)             # [T, F]   (MXU)
        agg = agg * pl.reciprocal(denom, approx=True)                 # divide on the EUP
        # ELU (alpha = 1)
        out_ref[:, h * F:(h + 1) * F] = jnp.where(
            agg > 0, agg, jnp.exp(jnp.minimum(agg, zero)) - 1.0)


# ----------------------------------------------------------------------------
# MHATLayer forward: host-side glue + single fused pallas_call
# ----------------------------------------------------------------------------
def mhat_forward(m_sim, d_sim, adj, head_params, *, num_heads, out_feats, k, slope,
                 merge='cat', dst_tile=None, mxu_dtype=jnp.bfloat16):
    L = len(head_params)
    N, Fm = m_sim.shape
    _, Fd = d_sim.shape
    H, F = num_heads, out_feats
    HF = H * F

    if dst_tile is None:
        dst_tile = next((t for t in (256, 128, 64, 32, 16, 8) if N % t == 0), N)
    assert N % dst_tile == 0 and (dst_tile % 8 == 0 or dst_tile == N)
    n_tiles = N // dst_tile

    # ---- stack per-layer-head parameters along a leading axis ----
    pr = jnp.stack([p['pr'][0] for p in head_params])        # [L, Fm]
    pi = jnp.stack([p['pi'][0] for p in head_params])        # [L, Fd]
    wm = jnp.stack([p['wm_t'] for p in head_params])         # [L, Fm, HF]
    wd = jnp.stack([p['wd_t'] for p in head_params])         # [L, Fd, HF]
    al = jnp.stack([p['attn_l'] for p in head_params])       # [L, H, F]
    ar = jnp.stack([p['attn_r'] for p in head_params])       # [L, H, F]

    # Gating scores (needed on the host anyway for the dense select_topk emulation).
    yl = jnp.abs(m_sim @ pr.T).T / jnp.linalg.norm(pr, axis=1, keepdims=True)  # [L, N]
    yr = jnp.abs(d_sim @ pi.T).T / jnp.linalg.norm(pi, axis=1, keepdims=True)  # [L, N]

    # Per-destination k-th largest incoming source score (select_topk threshold).
    # Rows with in-degree < k get -inf, i.e. keep every incident edge.
    kk = min(k, N)
    scores = jnp.where(adj[None, :, :] > 0, yl[:, None, :], -jnp.inf)  # [L, Nd, Ns]
    thresh = jax.lax.top_k(scores, kk)[0][..., kk - 1:kk]              # [L, Nd, 1]
    # TODO(synk): exact ties in yl keep >k edges here, while select_topk keeps exactly k.

    # Block-diagonal attention vectors: row h holds attn[h] at columns h*F:(h+1)*F,
    # so per-head logits become a single MXU matmul against h_m / h_d.
    eye = jnp.eye(H, dtype=jnp.float32)
    al_t = (al[:, :, None, :] * eye[None, :, :, None]).reshape(L, H, HF)
    ar_t = (ar[:, :, None, :] * eye[None, :, :, None]).reshape(L, H, HF)

    yl_col = yl[:, :, None]     # [L, N, 1]
    yl_row = yl[:, None, :]     # [L, 1, N]
    yr_col = yr[:, :, None]     # [L, N, 1]

    out_w = max(128, _round_up(HF, 128))   # lane-dense (unmasked) output stores

    kern = functools.partial(_mhat_fused_kernel, num_heads=H, out_feats=F,
                             slope=slope, out_width=out_w, mxu_dtype=mxu_dtype)

    out_padded = pl.pallas_call(
        kern,
        grid=(L, n_tiles),
        in_specs=[
            pl.BlockSpec((N, Fm), lambda l, j: (0, 0)),              # m_sim (all sources)
            pl.BlockSpec((dst_tile, Fd), lambda l, j: (j, 0)),       # d_sim (dst tile)
            pl.BlockSpec((dst_tile, N), lambda l, j: (j, 0)),        # adj   (dst rows)
            pl.BlockSpec((1, N, 1), lambda l, j: (l, 0, 0)),         # yl (col, sources)
            pl.BlockSpec((1, 1, N), lambda l, j: (l, 0, 0)),         # yl (row, sources)
            pl.BlockSpec((1, dst_tile, 1), lambda l, j: (l, j, 0)),  # yr (dst tile)
            pl.BlockSpec((1, dst_tile, 1), lambda l, j: (l, j, 0)),  # top-k threshold
            pl.BlockSpec((1, Fm, HF), lambda l, j: (l, 0, 0)),       # W_m^T (bf16)
            pl.BlockSpec((1, Fd, HF), lambda l, j: (l, 0, 0)),       # W_d^T (bf16)
            pl.BlockSpec((1, H, HF), lambda l, j: (l, 0, 0)),        # attn_l (block-diag)
            pl.BlockSpec((1, H, HF), lambda l, j: (l, 0, 0)),        # attn_r (block-diag)
        ],
        out_specs=pl.BlockSpec((dst_tile, out_w),
                               lambda l, j: (l * n_tiles + j, 0)),
        out_shape=jax.ShapeDtypeStruct((L * N, out_w), jnp.float32),
        scratch_shapes=[pltpu.VMEM((N, HF), jnp.float32),   # h_m  (all source nodes)
                        pltpu.VMEM((H, N), jnp.float32)],   # el^T (per-head src logits)
        compiler_params=pltpu.CompilerParams(
            dimension_semantics=("parallel", "arbitrary")),
    )(m_sim, d_sim, adj, yl_col, yl_row, yr_col, thresh,
      wm.astype(mxu_dtype), wd.astype(mxu_dtype), al_t, ar_t)

    per_head = out_padded.reshape(L, N, out_w)[:, :, :HF]    # [L, N, H*F]
    if merge == 'cat':
        return jnp.transpose(per_head, (1, 0, 2)).reshape(N, L * H, F)
    return jnp.mean(per_head.reshape(L, N, H, F), axis=0)


# ----------------------------------------------------------------------------
# Pure-JAX reference (sanity check)
# ----------------------------------------------------------------------------
def topk_in_edge_mask(adj, yl, k):
    """Dense equivalent of dgl.sampling.select_topk (top-k in-edges by source yl)."""
    N = adj.shape[1]
    kk = min(k, N)
    scores = jnp.where(adj > 0, yl[None, :], -jnp.inf)
    vals, idx = jax.lax.top_k(scores, kk)
    valid = jnp.isfinite(vals).astype(jnp.float32)
    onehot = jax.nn.one_hot(idx, N, dtype=jnp.float32)
    mask = jnp.einsum('dks,dk->ds', onehot, valid)
    return jnp.minimum(mask, 1.0) * adj


def nsgat_ref(m_sim, d_sim, adj, p, *, num_heads, out_feats, k, slope,
              mxu_dtype=jnp.float32):
    pr, pi = p['pr'], p['pi']
    yl = jnp.abs(m_sim @ pr[0]) / jnp.linalg.norm(pr)
    yr = jnp.abs(d_sim @ pi[0]) / jnp.linalg.norm(pi)
    mask = topk_in_edge_mask(adj, yl, k)
    gl = jax.nn.sigmoid(yl)[:, None]
    gr = jax.nn.sigmoid(yr)[:, None]
    dt = mxu_dtype
    h_m = jnp.dot((gl * m_sim).astype(dt), p['wm_t'].astype(dt),
                  preferred_element_type=jnp.float32).reshape(-1, num_heads, out_feats)
    h_d = jnp.dot((gr * d_sim).astype(dt), p['wd_t'].astype(dt),
                  preferred_element_type=jnp.float32).reshape(-1, num_heads, out_feats)
    el = jnp.sum(h_m * p['attn_l'][None], axis=-1)            # [N, H]
    er = jnp.sum(h_d * p['attn_r'][None], axis=-1)            # [N, H]
    e = er[:, None, :] + el[None, :, :]                       # [dst, src, H]
    e = jnp.where(e >= 0, e, slope * e)
    e = jnp.where(mask[..., None] > 0, e, -1e30)
    a = jax.nn.softmax(e, axis=1) * (mask[..., None] > 0)
    out = jnp.einsum('dsh,shf->dhf', a.astype(dt), h_m.astype(dt),
                     preferred_element_type=jnp.float32)
    return jnp.where(out > 0, out, jnp.expm1(jnp.minimum(out, 0.0)))


def mhat_ref(m_sim, d_sim, adj, head_params, **kw):
    return jnp.concatenate(
        [nsgat_ref(m_sim, d_sim, adj, p, **kw) for p in head_params], axis=1)


# ----------------------------------------------------------------------------
# Deterministic parameter init (xavier_normal with gain('relu') = sqrt(2))
# ----------------------------------------------------------------------------
def _xavier(key, shape, fan_in, fan_out, gain=jnp.sqrt(2.0)):
    std = gain * jnp.sqrt(2.0 / (fan_in + fan_out))
    return std * jax.random.normal(key, shape, dtype=jnp.float32)


def init_nsgat_params(key, Fm, Fd, num_heads, out_feats):
    HF = num_heads * out_feats
    k1, k2, k3, k4, k5, k6 = jax.random.split(key, 6)
    return {
        # Linear weights stored transposed ([in, out]) so the kernel does x @ W^T.
        'wm_t':  _xavier(k1, (Fm, HF), Fm, HF),
        'wd_t':  _xavier(k2, (Fd, HF), Fd, HF),
        # (fan computation differs slightly from torch xavier on a [1,H,F] tensor;
        #  init-only numerics for this synthetic demo.)
        'attn_l': _xavier(k3, (num_heads, out_feats), num_heads * out_feats, out_feats),
        'attn_r': _xavier(k4, (num_heads, out_feats), num_heads * out_feats, out_feats),
        'pr':    _xavier(k5, (1, Fm), Fm, 1),
        'pi':    _xavier(k6, (1, Fd), Fd, 1),
    }


# ----------------------------------------------------------------------------
if __name__ == "__main__":
    N = 16          # total graph nodes (8 "mrna" + 8 "disease")
    Fm = 32         # m_sim feature dim
    Fd = 24         # d_sim feature dim
    num_heads = 2   # NSGAT internal heads == MHATLayer head count
    out_feats = 8
    k = 8           # NSGAT default top-k
    slope = 0.2
    # feat_drop = attn_drop = 0.0 (dropout == identity)

    root = jax.random.PRNGKey(0)
    k_m, k_d, k_adj, k_params = jax.random.split(root, 4)

    m_sim = jax.random.normal(k_m, (N, Fm), dtype=jnp.float32)
    d_sim = jax.random.normal(k_d, (N, Fd), dtype=jnp.float32)

    # deterministic random graph; remove self loops then add self loops (dst x src)
    adj = (jax.random.uniform(k_adj, (N, N)) < 0.35).astype(jnp.float32)
    adj = adj * (1.0 - jnp.eye(N, dtype=jnp.float32)) + jnp.eye(N, dtype=jnp.float32)

    head_params = [init_nsgat_params(pk, Fm, Fd, num_heads, out_feats)
                   for pk in jax.random.split(k_params, num_heads)]

    out = mhat_forward(m_sim, d_sim, adj, head_params,
                       num_heads=num_heads, out_feats=out_feats, k=k, slope=slope,
                       merge='cat', dst_tile=8, mxu_dtype=jnp.bfloat16)
    out = jax.block_until_ready(out)
    assert out.shape == (N, num_heads * num_heads, out_feats), out.shape

    # Matched-precision reference (same bf16-on-MXU policy as the kernel).
    ref_bf16 = jax.block_until_ready(
        mhat_ref(m_sim, d_sim, adj, head_params,
                 num_heads=num_heads, out_feats=out_feats, k=k, slope=slope,
                 mxu_dtype=jnp.bfloat16))
    assert jnp.allclose(out, ref_bf16, atol=2e-2, rtol=2e-2), \
        float(jnp.abs(out - ref_bf16).max())

    # Loose end-to-end sanity check against the full-f32 reference (bf16 MXU inputs).
    ref_f32 = jax.block_until_ready(
        mhat_ref(m_sim, d_sim, adj, head_params,
                 num_heads=num_heads, out_feats=out_feats, k=k, slope=slope,
                 mxu_dtype=jnp.float32))
    assert jnp.allclose(out, ref_f32, atol=1e-1, rtol=1e-1), \
        float(jnp.abs(out - ref_f32).max())

    print("KERNEL_OK")
</pallas_src>

<mosaic_0001>
module attributes {stable_mosaic.version = 11 : i64} {
  func.func @_mhat_fused_kernel(%arg0: i32, %arg1: i32, %arg2: memref<16x32xf32, #tpu.memory_space<vmem>>, %arg3: memref<8x24xf32, #tpu.memory_space<vmem>>, %arg4: memref<8x16xf32, #tpu.memory_space<vmem>>, %arg5: memref<1x16x1xf32, #tpu.memory_space<vmem>>, %arg6: memref<1x1x16xf32, #tpu.memory_space<vmem>>, %arg7: memref<1x8x1xf32, #tpu.memory_space<vmem>>, %arg8: memref<1x8x1xf32, #tpu.memory_space<vmem>>, %arg9: memref<1x32x16xbf16, #tpu.memory_space<vmem>>, %arg10: memref<1x24x16xbf16, #tpu.memory_space<vmem>>, %arg11: memref<1x2x16xf32, #tpu.memory_space<vmem>>, %arg12: memref<1x2x16xf32, #tpu.memory_space<vmem>>, %arg13: memref<8x128xf32, #tpu.memory_space<vmem>>, %arg14: memref<16x16xf32, #tpu.memory_space<vmem>>, %arg15: memref<2x16xf32, #tpu.memory_space<vmem>>) attributes {dimension_semantics = [#tpu.dimension_semantics<parallel>, #tpu.dimension_semantics<arbitrary>], iteration_bounds = array<i64: 2, 2>, scalar_prefetch = 0 : i64, scratch_operands = 2 : i64, tpu.core_type = #tpu.core_type<tc>, window_params = [{pipeline_mode = #tpu.pipeline_mode<synchronous>, transform_indices = @transform_0, window_bounds = array<i64: 16, 32>}, {transform_indices = @transform_1, window_bounds = array<i64: 8, 24>}, {transform_indices = @transform_2, window_bounds = array<i64: 8, 16>}, {transform_indices = @transform_3, window_bounds = array<i64: 1, 16, 1>}, {transform_indices = @transform_4, window_bounds = array<i64: 1, 1, 16>}, {transform_indices = @transform_5, window_bounds = array<i64: 1, 8, 1>}, {transform_indices = @transform_6, window_bounds = array<i64: 1, 8, 1>}, {transform_indices = @transform_7, window_bounds = array<i64: 1, 32, 16>}, {transform_indices = @transform_8, window_bounds = array<i64: 1, 24, 16>}, {transform_indices = @transform_9, window_bounds = array<i64: 1, 2, 16>}, {transform_indices = @transform_10, window_bounds = array<i64: 1, 2, 16>}, {transform_indices = @transform_11, window_bounds = array<i64: 8, 128>}]} {
    %c0_i32 = arith.constant 0 : i32
    %0 = arith.cmpi eq, %arg1, %c0_i32 : i32
    %1 = arith.extui %0 : i1 to i32
    %c0_i32_0 = arith.constant 0 : i32
    %2 = arith.cmpi ne, %1, %c0_i32_0 : i32
    scf.if %2 {
      %c0_50 = arith.constant 0 : index
      %c0_51 = arith.constant 0 : index
      %c0_52 = arith.constant 0 : index
      %106 = vector.load %arg5[%c0_50, %c0_51, %c0_52] : memref<1x16x1xf32, #tpu.memory_space<vmem>>, vector<1x16x1xf32>
      %107 = vector.shape_cast %106 : vector<1x16x1xf32> to vector<16x1xf32>
      %108 = arith.negf %107 : vector<16x1xf32>
      %109 = math.exp %108 : vector<16x1xf32>
      %cst_53 = arith.constant 1.000000e+00 : f32
      %110 = vector.broadcast %cst_53 : f32 to vector<16x1xf32>
      %111 = arith.addf %110, %109 : vector<16x1xf32>
      %112 = arith.divf %110, %111 : vector<16x1xf32>
      %c0_54 = arith.constant 0 : index
      %c0_55 = arith.constant 0 : index
      %113 = vector.load %arg2[%c0_54, %c0_55] : memref<16x32xf32, #tpu.memory_space<vmem>>, vector<16x32xf32>
      %114 = vector.broadcast %112 : vector<16x1xf32> to vector<16x32xf32>
      %115 = arith.mulf %114, %113 : vector<16x32xf32>
      %116 = arith.truncf %115 : vector<16x32xf32> to vector<16x32xbf16>
      %c0_56 = arith.constant 0 : index
      %c0_57 = arith.constant 0 : index
      %c0_58 = arith.constant 0 : index
      %117 = vector.load %arg9[%c0_56, %c0_57, %c0_58] : memref<1x32x16xbf16, #tpu.memory_space<vmem>>, vector<1x32x16xbf16>
      %118 = vector.shape_cast %117 : vector<1x32x16xbf16> to vector<32x16xbf16>
      %cst_59 = arith.constant dense<0.000000e+00> : vector<16x16xf32>
      %119 = tpu.matmul %116, %118, %cst_59 {dimension_numbers = #tpu.dot_dimension_numbers<[1], [0], [0], [1], [0, 0, 1, 1], [], []>} : vector<16x32xbf16>, vector<32x16xbf16>, vector<16x16xf32> -> vector<16x16xf32>
      %c0_60 = arith.constant 0 : index
      %c0_61 = arith.constant 0 : index
      %120 = vector.load %arg14[%c0_60, %c0_61] : memref<16x16xf32, #tpu.memory_space<vmem>>, vector<16x16xf32>
      tpu.vector_store %arg14[%c0_60, %c0_61], %119 {strides = array<i32>} : memref<16x16xf32, #tpu.memory_space<vmem>>, vector<16x16xf32>,
      %c0_62 = arith.constant 0 : index
      %c0_63 = arith.constant 0 : index
      %c0_64 = arith.constant 0 : index
      %121 = vector.load %arg11[%c0_62, %c0_63, %c0_64] : memref<1x2x16xf32, #tpu.memory_space<vmem>>, vector<1x2x16xf32>
      %122 = vector.shape_cast %121 : vector<1x2x16xf32> to vector<2x16xf32>
      %cst_65 = arith.constant dense<0.000000e+00> : vector<2x16xf32>
      %123 = tpu.matmul %122, %119, %cst_65 {dimension_numbers = #tpu.dot_dimension_numbers<[1], [1], [0], [0], [0, 0, 1, 0], [], []>} : vector<2x16xf32>, vector<16x16xf32>, vector<2x16xf32> -> vector<2x16xf32>
      %c0_66 = arith.constant 0 : index
      %c0_67 = arith.constant 0 : index
      %124 = vector.load %arg15[%c0_66, %c0_67] : memref<2x16xf32, #tpu.memory_space<vmem>>, vector<2x16xf32>
      tpu.vector_store %arg15[%c0_66, %c0_67], %123 {strides = array<i32>} : memref<2x16xf32, #tpu.memory_space<vmem>>, vector<2x16xf32>,
    } else {
    }
    %c0 = arith.constant 0 : index
    %c0_1 = arith.constant 0 : index
    %c0_2 = arith.constant 0 : index
    %3 = vector.load %arg7[%c0, %c0_1, %c0_2] : memref<1x8x1xf32, #tpu.memory_space<vmem>>, vector<1x8x1xf32>
    %4 = vector.shape_cast %3 : vector<1x8x1xf32> to vector<8x1xf32>
    %5 = arith.negf %4 : vector<8x1xf32>
    %6 = math.exp %5 : vector<8x1xf32>
    %cst = arith.constant 1.000000e+00 : f32
    %7 = vector.broadcast %cst : f32 to vector<8x1xf32>
    %8 = arith.addf %7, %6 : vector<8x1xf32>
    %9 = arith.divf %7, %8 : vector<8x1xf32>
    %c0_3 = arith.constant 0 : index
    %c0_4 = arith.constant 0 : index
    %10 = vector.load %arg3[%c0_3, %c0_4] : memref<8x24xf32, #tpu.memory_space<vmem>>, vector<8x24xf32>
    %11 = vector.broadcast %9 : vector<8x1xf32> to vector<8x24xf32>
    %12 = arith.mulf %11, %10 : vector<8x24xf32>
    %13 = arith.truncf %12 : vector<8x24xf32> to vector<8x24xbf16>
    %c0_5 = arith.constant 0 : index
    %c0_6 = arith.constant 0 : index
    %c0_7 = arith.constant 0 : index
    %14 = vector.load %arg10[%c0_5, %c0_6, %c0_7] : memref<1x24x16xbf16, #tpu.memory_space<vmem>>, vector<1x24x16xbf16>
    %15 = vector.shape_cast %14 : vector<1x24x16xbf16> to vector<24x16xbf16>
    %cst_8 = arith.constant dense<0.000000e+00> : vector<8x16xf32>
    %16 = tpu.matmul %13, %15, %cst_8 {dimension_numbers = #tpu.dot_dimension_numbers<[1], [0], [0], [1], [0, 0, 1, 1], [], []>} : vector<8x24xbf16>, vector<24x16xbf16>, vector<8x16xf32> -> vector<8x16xf32>
    %c0_9 = arith.constant 0 : index
    %c0_10 = arith.constant 0 : index
    %c0_11 = arith.constant 0 : index
    %17 = vector.load %arg12[%c0_9, %c0_10, %c0_11] : memref<1x2x16xf32, #tpu.memory_space<vmem>>, vector<1x2x16xf32>
    %18 = vector.shape_cast %17 : vector<1x2x16xf32> to vector<2x16xf32>
    %cst_12 = arith.constant dense<0.000000e+00> : vector<8x2xf32>
    %19 = tpu.matmul %16, %18, %cst_12 {dimension_numbers = #tpu.dot_dimension_numbers<[1], [1], [0], [0], [0, 0, 1, 0], [], []>} : vector<8x16xf32>, vector<2x16xf32>, vector<8x2xf32> -> vector<8x2xf32>
    %c0_13 = arith.constant 0 : index
    %c0_14 = arith.constant 0 : index
    %20 = vector.load %arg4[%c0_13, %c0_14] : memref<8x16xf32, #tpu.memory_space<vmem>>, vector<8x16xf32>
    %cst_15 = arith.constant 0.000000e+00 : f32
    %21 = vector.broadcast %cst_15 : f32 to vector<8x16xf32>
    %22 = arith.cmpf ogt, %20, %21 : vector<8x16xf32>
    %c0_16 = arith.constant 0 : index
    %c0_17 = arith.constant 0 : index
    %c0_18 = arith.constant 0 : index
    %23 = vector.load %arg6[%c0_16, %c0_17, %c0_18] : memref<1x1x16xf32, #tpu.memory_space<vmem>>, vector<1x1x16xf32>
    %24 = vector.shape_cast %23 : vector<1x1x16xf32> to vector<1x16xf32>
    %c0_19 = arith.constant 0 : index
    %c0_20 = arith.constant 0 : index
    %c0_21 = arith.constant 0 : index
    %25 = vector.load %arg8[%c0_19, %c0_20, %c0_21] : memref<1x8x1xf32, #tpu.memory_space<vmem>>, vector<1x8x1xf32>
    %26 = vector.shape_cast %25 : vector<1x8x1xf32> to vector<8x1xf32>
    %27 = vector.broadcast %24 : vector<1x16xf32> to vector<8x16xf32>
    %28 = vector.broadcast %26 : vector<8x1xf32> to vector<8x16xf32>
    %29 = arith.cmpf oge, %27, %28 : vector<8x16xf32>
    %30 = arith.andi %22, %29 : vector<8x16xi1>
    %cst_22 = arith.constant 0.000000e+00 : f32
    %cst_23 = arith.constant -1.000000e+30 : f32
    %31 = vector.broadcast %cst_22 : f32 to vector<8x16xf32>
    %32 = vector.broadcast %cst_23 : f32 to vector<8x16xf32>
    %33 = arith.select %30, %31, %32 : vector<8x16xi1>, vector<8x16xf32>
    %c0_24 = arith.constant 0 : index
    %c0_25 = arith.constant 0 : index
    %34 = vector.load %arg14[%c0_24, %c0_25] : memref<16x16xf32, #tpu.memory_space<vmem>>, vector<16x16xf32>
    %c0_26 = arith.constant 0 : index
    %c0_27 = arith.constant 0 : index
    %35 = vector.load %arg15[%c0_26, %c0_27] : memref<2x16xf32, #tpu.memory_space<vmem>>, vector<2x16xf32>
    %cst_28 = arith.constant 0.000000e+00 : f32
    %36 = vector.broadcast %cst_28 : f32 to vector<8x128xf32>
    %c0_29 = arith.constant 0 : index
    %c0_30 = arith.constant 0 : index
    %37 = vector.load %arg13[%c0_29, %c0_30] : memref<8x128xf32, #tpu.memory_space<vmem>>, vector<8x128xf32>
    tpu.vector_store %arg13[%c0_29, %c0_30], %36 {strides = array<i32>} : memref<8x128xf32, #tpu.memory_space<vmem>>, vector<8x128xf32>,
    %38 = vector.extract_strided_slice %19 {offsets = [0, 0], sizes = [8, 1], strides = [1, 1]} : vector<8x2xf32> to vector<8x1xf32>
    %39 = vector.extract_strided_slice %35 {offsets = [0, 0], sizes = [1, 16], strides = [1, 1]} : vector<2x16xf32> to vector<1x16xf32>
    %40 = vector.broadcast %38 : vector<8x1xf32> to vector<8x16xf32>
    %41 = vector.broadcast %39 : vector<1x16xf32> to vector<8x16xf32>
    %42 = arith.addf %40, %41 : vector<8x16xf32>
    %cst_31 = arith.constant 0.000000e+00 : f32
    %43 = vector.broadcast %cst_31 : f32 to vector<8x16xf32>
    %44 = arith.cmpf oge, %42, %43 : vector<8x16xf32>
    %cst_32 = arith.constant 2.000000e-01 : f32
    %45 = vector.broadcast %cst_32 : f32 to vector<8x16xf32>
    %46 = arith.mulf %45, %42 : vector<8x16xf32>
    %47 = arith.select %44, %42, %46 : vector<8x16xi1>, vector<8x16xf32>
    %48 = arith.addf %47, %33 : vector<8x16xf32>
    %cst_33 = arith.constant dense<0xFF800000> : vector<8xf32>
    %49 = vector.multi_reduction <maximumf>, %48, %cst_33 [1] : vector<8x16xf32> to vector<8xf32>
    %50 = vector.shape_cast %49 : vector<8xf32> to vector<8x1xf32>
    %51 = vector.broadcast %50 : vector<8x1xf32> to vector<8x16xf32>
    %52 = arith.subf %48, %51 : vector<8x16xf32>
    %53 = math.exp %52 : vector<8x16xf32>
    %cst_34 = arith.constant dense<0.000000e+00> : vector<8xf32>
    %54 = vector.multi_reduction <add>, %53, %cst_34 [1] : vector<8x16xf32> to vector<8xf32>
    %55 = vector.shape_cast %54 : vector<8xf32> to vector<8x1xf32>
    %56 = arith.truncf %53 : vector<8x16xf32> to vector<8x16xbf16>
    %57 = vector.extract_strided_slice %34 {offsets = [0, 0], sizes = [16, 8], strides = [1, 1]} : vector<16x16xf32> to vector<16x8xf32>
    %58 = arith.truncf %57 : vector<16x8xf32> to vector<16x8xbf16>
    %cst_35 = arith.constant dense<0.000000e+00> : vector<8x8xf32>
    %59 = tpu.matmul %56, %58, %cst_35 {dimension_numbers = #tpu.dot_dimension_numbers<[1], [0], [0], [1], [0, 0, 1, 1], [], []>} : vector<8x16xbf16>, vector<16x8xbf16>, vector<8x8xf32> -> vector<8x8xf32>
    %60 = tpu.reciprocal %55 {approx = true} : vector<8x1xf32> -> vector<8x1xf32>
    %61 = vector.broadcast %60 : vector<8x1xf32> to vector<8x8xf32>
    %62 = arith.mulf %59, %61 : vector<8x8xf32>
    %cst_36 = arith.constant 0.000000e+00 : f32
    %63 = vector.broadcast %cst_36 : f32 to vector<8x8xf32>
    %64 = arith.cmpf ogt, %62, %63 : vector<8x8xf32>
    %cst_37 = arith.constant 0.000000e+00 : f32
    %65 = vector.broadcast %cst_37 : f32 to vector<8x8xf32>
    %66 = arith.minimumf %62, %65 : vector<8x8xf32>
    %67 = math.exp %66 : vector<8x8xf32>
    %cst_38 = arith.constant 1.000000e+00 : f32
    %68 = vector.broadcast %cst_38 : f32 to vector<8x8xf32>
    %69 = arith.subf %67, %68 : vector<8x8xf32>
    %70 = arith.select %64, %62, %69 : vector<8x8xi1>, vector<8x8xf32>
    %c0_39 = arith.constant 0 : index
    %c0_40 = arith.constant 0 : index
    %71 = vector.load %arg13[%c0_39, %c0_40] : memref<8x128xf32, #tpu.memory_space<vmem>>, vector<8x8xf32>
    tpu.vector_store %arg13[%c0_39, %c0_40], %70 {strides = array<i32>} : memref<8x128xf32, #tpu.memory_space<vmem>>, vector<8x8xf32>,
    %72 = vector.extract_strided_slice %19 {offsets = [0, 1], sizes = [8, 1], strides = [1, 1]} : vector<8x2xf32> to vector<8x1xf32>
    %73 = vector.extract_strided_slice %35 {offsets = [1, 0], sizes = [1, 16], strides = [1, 1]} : vector<2x16xf32> to vector<1x16xf32>
    %74 = vector.broadcast %72 : vector<8x1xf32> to vector<8x16xf32>
    %75 = vector.broadcast %73 : vector<1x16xf32> to vector<8x16xf32>
    %76 = arith.addf %74, %75 : vector<8x16xf32>
    %cst_41 = arith.constant 0.000000e+00 : f32
    %77 = vector.broadcast %cst_41 : f32 to vector<8x16xf32>
    %78 = arith.cmpf oge, %76, %77 : vector<8x16xf32>
    %cst_42 = arith.constant 2.000000e-01 : f32
    %79 = vector.broadcast %cst_42 : f32 to vector<8x16xf32>
    %80 = arith.mulf %79, %76 : vector<8x16xf32>
    %81 = arith.select %78, %76, %80 : vector<8x16xi1>, vector<8x16xf32>
    %82 = arith.addf %81, %33 : vector<8x16xf32>
    %cst_43 = arith.constant dense<0xFF800000> : vector<8xf32>
    %83 = vector.multi_reduction <maximumf>, %82, %cst_43 [1] : vector<8x16xf32> to vector<8xf32>
    %84 = vector.shape_cast %83 : vector<8xf32> to vector<8x1xf32>
    %85 = vector.broadcast %84 : vector<8x1xf32> to vector<8x16xf32>
    %86 = arith.subf %82, %85 : vector<8x16xf32>
    %87 = math.exp %86 : vector<8x16xf32>
    %cst_44 = arith.constant dense<0.000000e+00> : vector<8xf32>
    %88 = vector.multi_reduction <add>, %87, %cst_44 [1] : vector<8x16xf32> to vector<8xf32>
    %89 = vector.shape_cast %88 : vector<8xf32> to vector<8x1xf32>
    %90 = arith.truncf %87 : vector<8x16xf32> to vector<8x16xbf16>
    %91 = vector.extract_strided_slice %34 {offsets = [0, 8], sizes = [16, 8], strides = [1, 1]} : vector<16x16xf32> to vector<16x8xf32>
    %92 = arith.truncf %91 : vector<16x8xf32> to vector<16x8xbf16>
    %cst_45 = arith.constant dense<0.000000e+00> : vector<8x8xf32>
    %93 = tpu.matmul %90, %92, %cst_45 {dimension_numbers = #tpu.dot_dimension_numbers<[1], [0], [0], [1], [0, 0, 1, 1], [], []>} : vector<8x16xbf16>, vector<16x8xbf16>, vector<8x8xf32> -> vector<8x8xf32>
    %94 = tpu.reciprocal %89 {approx = true} : vector<8x1xf32> -> vector<8x1xf32>
    %95 = vector.broadcast %94 : vector<8x1xf32> to vector<8x8xf32>
    %96 = arith.mulf %93, %95 : vector<8x8xf32>
    %cst_46 = arith.constant 0.000000e+00 : f32
    %97 = vector.broadcast %cst_46 : f32 to vector<8x8xf32>
    %98 = arith.cmpf ogt, %96, %97 : vector<8x8xf32>
    %cst_47 = arith.constant 0.000000e+00 : f32
    %99 = vector.broadcast %cst_47 : f32 to vector<8x8xf32>
    %100 = arith.minimumf %96, %99 : vector<8x8xf32>
    %101 = math.exp %100 : vector<8x8xf32>
    %cst_48 = arith.constant 1.000000e+00 : f32
    %102 = vector.broadcast %cst_48 : f32 to vector<8x8xf32>
    %103 = arith.subf %101, %102 : vector<8x8xf32>
    %104 = arith.select %98, %96, %103 : vector<8x8xi1>, vector<8x8xf32>
    %c0_49 = arith.constant 0 : index
    %c8 = arith.constant 8 : index
    %105 = vector.load %arg13[%c0_49, %c8] : memref<8x128xf32, #tpu.memory_space<vmem>>, vector<8x8xf32>
    tpu.vector_store %arg13[%c0_49, %c8], %104 {strides = array<i32>} : memref<8x128xf32, #tpu.memory_space<vmem>>, vector<8x8xf32>,
    return
  }
  func.func @transform_0(%arg0: i32, %arg1: i32) -> (i32, i32) {
    %c0_i32 = arith.constant 0 : i32
    %c0_i32_0 = arith.constant 0 : i32
    %c0_i32_1 = arith.constant 0 : i32
    return %c0_i32, %c0_i32_0 : i32, i32
  }
  func.func @transform_1(%arg0: i32, %arg1: i32) -> (i32, i32) {
    %c0_i32 = arith.constant 0 : i32
    %c0_i32_0 = arith.constant 0 : i32
    return %arg1, %c0_i32 : i32, i32
  }
  func.func @transform_2(%arg0: i32, %arg1: i32) -> (i32, i32) {
    %c0_i32 = arith.constant 0 : i32
    %c0_i32_0 = arith.constant 0 : i32
    return %arg1, %c0_i32 : i32, i32
  }
  func.func @transform_3(%arg0: i32, %arg1: i32) -> (i32, i32, i32) {
    %c0_i32 = arith.constant 0 : i32
    %c0_i32_0 = arith.constant 0 : i32
    %c0_i32_1 = arith.constant 0 : i32
    return %arg0, %c0_i32, %c0_i32_0 : i32, i32, i32
  }
  func.func @transform_4(%arg0: i32, %arg1: i32) -> (i32, i32, i32) {
    %c0_i32 = arith.constant 0 : i32
    %c0_i32_0 = arith.constant 0 : i32
    %c0_i32_1 = arith.constant 0 : i32
    return %arg0, %c0_i32, %c0_i32_0 : i32, i32, i32
  }
  func.func @transform_5(%arg0: i32, %arg1: i32) -> (i32, i32, i32) {
    %c0_i32 = arith.constant 0 : i32
    %c0_i32_0 = arith.constant 0 : i32
    return %arg0, %arg1, %c0_i32 : i32, i32, i32
  }
  func.func @transform_6(%arg0: i32, %arg1: i32) -> (i32, i32, i32) {
    %c0_i32 = arith.constant 0 : i32
    %c0_i32_0 = arith.constant 0 : i32
    return %arg0, %arg1, %c0_i32 : i32, i32, i32
  }
  func.func @transform_7(%arg0: i32, %arg1: i32) -> (i32, i32, i32) {
    %c0_i32 = arith.constant 0 : i32
    %c0_i32_0 = arith.constant 0 : i32
    %c0_i32_1 = arith.constant 0 : i32
    return %arg0, %c0_i32, %c0_i32_0 : i32, i32, i32
  }
  func.func @transform_8(%arg0: i32, %arg1: i32) -> (i32, i32, i32) {
    %c0_i32 = arith.constant 0 : i32
    %c0_i32_0 = arith.constant 0 : i32
    %c0_i32_1 = arith.constant 0 : i32
    return %arg0, %c0_i32, %c0_i32_0 : i32, i32, i32
  }
  func.func @transform_9(%arg0: i32, %arg1: i32) -> (i32, i32, i32) {
    %c0_i32 = arith.constant 0 : i32
    %c0_i32_0 = arith.constant 0 : i32
    %c0_i32_1 = arith.constant 0 : i32
    return %arg0, %c0_i32, %c0_i32_0 : i32, i32, i32
  }
  func.func @transform_10(%arg0: i32, %arg1: i32) -> (i32, i32, i32) {
    %c0_i32 = arith.constant 0 : i32
    %c0_i32_0 = arith.constant 0 : i32
    %c0_i32_1 = arith.constant 0 : i32
    return %arg0, %c0_i32, %c0_i32_0 : i32, i32, i32
  }
  func.func @transform_11(%arg0: i32, %arg1: i32) -> (i32, i32) {
    %c2_i32 = arith.constant 2 : i32
    %0 = arith.muli %arg0, %c2_i32 : i32
    %1 = arith.addi %0, %arg1 : i32
    %c0_i32 = arith.constant 0 : i32
    %c0_i32_0 = arith.constant 0 : i32
    return %1, %c0_i32 : i32, i32
  }
}

</mosaic_0001>

<llo_original>
// kernel: tpu_custom_call.1
$region0: #{tpu_custom_call.1}
  #allocation0 [shape = 'u32[]', space=smem, size = 0x4, offset = 0x4, fixed_abs, tag = 'smem constant byte address 0x4 - core index']
  #allocation1 [shape = 'u32[144,128]{1,0:T(1,128)}', space=vmem, size = 0x12000, scoped, tag = 'internal scratch']
  #allocation2 [shape = 'f32[16,16]{1,0:T(8,128)}', space=vmem, size = 0x2000, scoped, tag = 'scratch operand']
  #allocation3 [shape = 'f32[2,16]{1,0:T(2,128)}', space=vmem, size = 0x400, scoped, tag = 'scratch operand']
  %s0 = inlined_call_operand.vmem [shape: f32[16,32], index: 0, kind: input, shape index: {}]
  %s1 = inlined_call_operand.vmem [shape: f32[16,24], index: 1, kind: input, shape index: {}]
  %s2 = inlined_call_operand.vmem [shape: f32[16,16], index: 2, kind: input, shape index: {}]
  %s3 = inlined_call_operand.vmem [shape: f32[2,16,1], index: 3, kind: input, shape index: {}]
  %s4 = inlined_call_operand.vmem [shape: f32[2,1,16], index: 4, kind: input, shape index: {}]
  %s5 = inlined_call_operand.vmem [shape: f32[2,16,1], index: 5, kind: input, shape index: {}]
  %s6 = inlined_call_operand.vmem [shape: f32[2,16,1], index: 6, kind: input, shape index: {}]
  %s7 = inlined_call_operand.vmem [shape: bf16[2,32,16], index: 7, kind: input, shape index: {}]
  %s8 = inlined_call_operand.vmem [shape: bf16[2,24,16], index: 8, kind: input, shape index: {}]
  %s9 = inlined_call_operand.vmem [shape: f32[2,2,16], index: 9, kind: input, shape index: {}]
  %s10 = inlined_call_operand.vmem [shape: f32[2,2,16], index: 10, kind: input, shape index: {}]
  %s11 = inlined_call_operand.hbm [shape: f32[32,128], index: 11, kind: output, shape index: {}]
  %s12 = sld [smem:[#allocation0]]
  $region81: #{tpu_custom_call.1} parent=0
    _
  %s14 = ssub.s32 1, %s12
  %s15 = scalar_select 0, %s14, %s12
  $region1: #{tpu_custom_call.1} parent=0
    #allocation4 [shape = 'u8[8192]{0}', space=vmem, size = 0x2000, scoped, tag = 'output window, operand 0']
    #allocation5 [shape = 's32[2]{0}', space=sflag, size = 0x8, scoped, tag = 'scoped memory for tpu_custom_call.1']
    %16 = vsyncpa [#allocation5], 0
    %s17 = scalar_lea.sflag [#allocation5], 1
    %18 = vsyncpa %s17, 0
    loop: start=0, step=1, limit=6
    $region2: #{tpu_custom_call.1} parent=1 // loop_pre_header
      _
    $region3: #{tpu_custom_call.1} parent=1 // loop_header
      %s20 = sphi 0, %s24
      %p21 = scmp.ge.s32.totalorder %s20, 6
      %s27 = sphi 0, %s39
      %s28 = sphi 0, %s35
      %s29 = sphi 0, %s27
      %s30 = sphi 0, %s28
      %s31 = sphi 0, %s29
      %s32 = sphi 0, %s30
      %s40 = sphi 0, %s40
      %s42 = sphi 0, %s40
      %s43 = sphi 0, %s42
      %s57 = sphi 0, %s43
      %s63 = sphi 0, %s65
      %s66 = sphi 0, %s63
      %s67 = sphi 0, %s66
      %s83 = sphi 0, %s67
      %s89 = sphi 0, %s91
      %s92 = sphi 0, %s89
      %s93 = sphi 0, %s92
      %s109 = sphi 0, %s93
      %s115 = sphi 0, %s117
      %s118 = sphi 0, %s115
      %s119 = sphi 0, %s118
      %s135 = sphi 0, %s119
      %s141 = sphi 0, %s143
      %s144 = sphi 0, %s141
      %s145 = sphi 0, %s144
      %s161 = sphi 0, %s145
      %s169 = sphi 0, %s171
      %s172 = sphi 0, %s169
      %s173 = sphi 0, %s172
      %s189 = sphi 0, %s173
      %s197 = sphi 0, %s199
      %s200 = sphi 0, %s197
      %s201 = sphi 0, %s200
      %s217 = sphi 0, %s201
      %s223 = sphi 0, %s225
      %s226 = sphi 0, %s223
      %s227 = sphi 0, %s226
      %s243 = sphi 0, %s227
      %s249 = sphi 0, %s251
      %s252 = sphi 0, %s249
      %s253 = sphi 0, %s252
      %s269 = sphi 0, %s253
      %s275 = sphi 0, %s277
      %s278 = sphi 0, %s275
      %s279 = sphi 0, %s278
      %s295 = sphi 0, %s279
      %s301 = sphi 0, %s303
      %s304 = sphi 0, %s301
      %s305 = sphi 0, %s304
      %s321 = sphi 0, %s305
      %s331 = sphi 0, %s333
      %s334 = sphi 0, %s331
      %s335 = sphi 0, %s334
      %s351 = sphi 0, %s335
    $region4: #{tpu_custom_call.1} parent=1 // loop_header_branch
      %23 = sbr.rel (%p21) target = $region8
    $region5: #{tpu_custom_call.1} parent=1 // loop_body
      %s25 = ssub.s32 %s20, 1
      %s26 = ssub.s32 %s20, 2
      %s33 = sadd.s32 1, %s28
      %p34 = scmp.ge.s32.totalorder %s33, 2
      %s35 = scalar_select %p34, 0, %s33
      %s36 = sadd.s32 1, %s27
      %s37 = scalar_select %p34, %s36, %s27
      %p38 = scmp.ge.s32.totalorder %s37, 2
      %s39 = scalar_select %p38, 0, %s37
      %s41 = sadd.s32 %s40, 1
      %p44 = scmp.eq.s32.totalorder %s20, 3
      %p45 = scmp.ne.s32.totalorder %s40, %s42
      %p46 = scmp.eq.s32.totalorder %s20, 0
      %p47 = por %p45, %p46
      %p48 = scmp.ne.s32.totalorder %s40, %s42
      %p49 = scmp.eq.s32.totalorder %s25, 3
      %p50 = por %p48, %p49
      %p51 = scmp.ne.s32.totalorder %s42, %s43
      %p52 = scmp.eq.s32.totalorder %s25, 0
      %p53 = por %p51, %p52
      %p54 = scmp.ne.s32.totalorder %s42, %s43
      %p55 = scmp.eq.s32.totalorder %s26, 3
      %p56 = por %p54, %p55
      %p58 = scmp.ne.s32.totalorder %s43, %s57
      %p59 = scmp.eq.s32.totalorder %s26, 0
      %p60 = por %p58, %p59
      %s61 = ssub.s32 %s28, %s35
      %p62 = scmp.eq.s32.totalorder %s61, 0
      %s64 = sadd.s32 %s63, 1
      %s65 = scalar_select %p62, %s63, %s64
      %p68 = pneg %p62
      %p69 = scmp.eq.s32.totalorder %s20, 3
      %p70 = por %p68, %p69
      %p71 = scmp.ne.s32.totalorder %s63, %s66
      %p72 = scmp.eq.s32.totalorder %s20, 0
      %p73 = por %p71, %p72
      %p74 = scmp.ne.s32.totalorder %s63, %s66
      %p75 = scmp.eq.s32.totalorder %s25, 3
      %p76 = por %p74, %p75
      %p77 = scmp.ne.s32.totalorder %s66, %s67
      %p78 = scmp.eq.s32.totalorder %s25, 0
      %p79 = por %p77, %p78
      %p80 = scmp.ne.s32.totalorder %s66, %s67
      %p81 = scmp.eq.s32.totalorder %s26, 3
      %p82 = por %p80, %p81
      %p84 = scmp.ne.s32.totalorder %s67, %s83
      %p85 = scmp.eq.s32.totalorder %s26, 0
      %p86 = por %p84, %p85
      %s87 = ssub.s32 %s28, %s35
      %p88 = scmp.eq.s32.totalorder %s87, 0
      %s90 = sadd.s32 %s89, 1
      %s91 = scalar_select %p88, %s89, %s90
      %p94 = pneg %p88
      %p95 = scmp.eq.s32.totalorder %s20, 3
      %p96 = por %p94, %p95
      %p97 = scmp.ne.s32.totalorder %s89, %s92
      %p98 = scmp.eq.s32.totalorder %s20, 0
      %p99 = por %p97, %p98
      %p100 = scmp.ne.s32.totalorder %s89, %s92
      %p101 = scmp.eq.s32.totalorder %s25, 3
      %p102 = por %p100, %p101
      %p103 = scmp.ne.s32.totalorder %s92, %s93
      %p104 = scmp.eq.s32.totalorder %s25, 0
      %p105 = por %p103, %p104
      %p106 = scmp.ne.s32.totalorder %s92, %s93
      %p107 = scmp.eq.s32.totalorder %s26, 3
      %p108 = por %p106, %p107
      %p110 = scmp.ne.s32.totalorder %s93, %s109
      %p111 = scmp.eq.s32.totalorder %s26, 0
      %p112 = por %p110, %p111
      %s113 = ssub.s32 %s27, %s39
      %p114 = scmp.eq.s32.totalorder %s113, 0
      %s116 = sadd.s32 %s115, 1
      %s117 = scalar_select %p114, %s115, %s116
      %p120 = pneg %p114
      %p121 = scmp.eq.s32.totalorder %s20, 3
      %p122 = por %p120, %p121
      %p123 = scmp.ne.s32.totalorder %s115, %s118
      %p124 = scmp.eq.s32.totalorder %s20, 0
      %p125 = por %p123, %p124
      %p126 = scmp.ne.s32.totalorder %s115, %s118
      %p127 = scmp.eq.s32.totalorder %s25, 3
      %p128 = por %p126, %p127
      %p129 = scmp.ne.s32.totalorder %s118, %s119
      %p130 = scmp.eq.s32.totalorder %s25, 0
      %p131 = por %p129, %p130
      %p132 = scmp.ne.s32.totalorder %s118, %s119
      %p133 = scmp.eq.s32.totalorder %s26, 3
      %p134 = por %p132, %p133
      %p136 = scmp.ne.s32.totalorder %s119, %s135
      %p137 = scmp.eq.s32.totalorder %s26, 0
      %p138 = por %p136, %p137
      %s139 = ssub.s32 %s27, %s39
      %p140 = scmp.eq.s32.totalorder %s139, 0
      %s142 = sadd.s32 %s141, 1
      %s143 = scalar_select %p140, %s141, %s142
      %p146 = pneg %p140
      %p147 = scmp.eq.s32.totalorder %s20, 3
      %p148 = por %p146, %p147
      %p149 = scmp.ne.s32.totalorder %s141, %s144
      %p150 = scmp.eq.s32.totalorder %s20, 0
      %p151 = por %p149, %p150
      %p152 = scmp.ne.s32.totalorder %s141, %s144
      %p153 = scmp.eq.s32.totalorder %s25, 3
      %p154 = por %p152, %p153
      %p155 = scmp.ne.s32.totalorder %s144, %s145
      %p156 = scmp.eq.s32.totalorder %s25, 0
      %p157 = por %p155, %p156
      %p158 = scmp.ne.s32.totalorder %s144, %s145
      %p159 = scmp.eq.s32.totalorder %s26, 3
      %p160 = por %p158, %p159
      %p162 = scmp.ne.s32.totalorder %s145, %s161
      %p163 = scmp.eq.s32.totalorder %s26, 0
      %p164 = por %p162, %p163
      %s165 = ssub.s32 %s27, %s39
      %s166 = ssub.s32 %s28, %s35
      %s167 = sor.u32 %s165, %s166
      %p168 = scmp.eq.s32.totalorder %s167, 0
      %s170 = sadd.s32 %s169, 1
      %s171 = scalar_select %p168, %s169, %s170
      %p174 = pneg %p168
      %p175 = scmp.eq.s32.totalorder %s20, 3
      %p176 = por %p174, %p175
      %p177 = scmp.ne.s32.totalorder %s169, %s172
      %p178 = scmp.eq.s32.totalorder %s20, 0
      %p179 = por %p177, %p178
      %p180 = scmp.ne.s32.totalorder %s169, %s172
      %p181 = scmp.eq.s32.totalorder %s25, 3
      %p182 = por %p180, %p181
      %p183 = scmp.ne.s32.totalorder %s172, %s173
      %p184 = scmp.eq.s32.totalorder %s25, 0
      %p185 = por %p183, %p184
      %p186 = scmp.ne.s32.totalorder %s172, %s173
      %p187 = scmp.eq.s32.totalorder %s26, 3
      %p188 = por %p186, %p187
      %p190 = scmp.ne.s32.totalorder %s173, %s189
      %p191 = scmp.eq.s32.totalorder %s26, 0
      %p192 = por %p190, %p191
      %s193 = ssub.s32 %s27, %s39
      %s194 = ssub.s32 %s28, %s35
      %s195 = sor.u32 %s193, %s194
      %p196 = scmp.eq.s32.totalorder %s195, 0
      %s198 = sadd.s32 %s197, 1
      %s199 = scalar_select %p196, %s197, %s198
      %p202 = pneg %p196
      %p203 = scmp.eq.s32.totalorder %s20, 3
      %p204 = por %p202, %p203
      %p205 = scmp.ne.s32.totalorder %s197, %s200
      %p206 = scmp.eq.s32.totalorder %s20, 0
      %p207 = por %p205, %p206
      %p208 = scmp.ne.s32.totalorder %s197, %s200
      %p209 = scmp.eq.s32.totalorder %s25, 3
      %p210 = por %p208, %p209
      %p211 = scmp.ne.s32.totalorder %s200, %s201
      %p212 = scmp.eq.s32.totalorder %s25, 0
      %p213 = por %p211, %p212
      %p214 = scmp.ne.s32.totalorder %s200, %s201
      %p215 = scmp.eq.s32.totalorder %s26, 3
      %p216 = por %p214, %p215
      %p218 = scmp.ne.s32.totalorder %s201, %s217
      %p219 = scmp.eq.s32.totalorder %s26, 0
      %p220 = por %p218, %p219
      %s221 = ssub.s32 %s27, %s39
      %p222 = scmp.eq.s32.totalorder %s221, 0
      %s224 = sadd.s32 %s223, 1
      %s225 = scalar_select %p222, %s223, %s224
      %p228 = pneg %p222
      %p229 = scmp.eq.s32.totalorder %s20, 3
      %p230 = por %p228, %p229
      %p231 = scmp.ne.s32.totalorder %s223, %s226
      %p232 = scmp.eq.s32.totalorder %s20, 0
      %p233 = por %p231, %p232
      %p234 = scmp.ne.s32.totalorder %s223, %s226
      %p235 = scmp.eq.s32.totalorder %s25, 3
      %p236 = por %p234, %p235
      %p237 = scmp.ne.s32.totalorder %s226, %s227
      %p238 = scmp.eq.s32.totalorder %s25, 0
      %p239 = por %p237, %p238
      %p240 = scmp.ne.s32.totalorder %s226, %s227
      %p241 = scmp.eq.s32.totalorder %s26, 3
      %p242 = por %p240, %p241
      %p244 = scmp.ne.s32.totalorder %s227, %s243
      %p245 = scmp.eq.s32.totalorder %s26, 0
      %p246 = por %p244, %p245
      %s247 = ssub.s32 %s27, %s39
      %p248 = scmp.eq.s32.totalorder %s247, 0
      %s250 = sadd.s32 %s249, 1
      %s251 = scalar_select %p248, %s249, %s250
      %p254 = pneg %p248
      %p255 = scmp.eq.s32.totalorder %s20, 3
      %p256 = por %p254, %p255
      %p257 = scmp.ne.s32.totalorder %s249, %s252
      %p258 = scmp.eq.s32.totalorder %s20, 0
      %p259 = por %p257, %p258
      %p260 = scmp.ne.s32.totalorder %s249, %s252
      %p261 = scmp.eq.s32.totalorder %s25, 3
      %p262 = por %p260, %p261
      %p263 = scmp.ne.s32.totalorder %s252, %s253
      %p264 = scmp.eq.s32.totalorder %s25, 0
      %p265 = por %p263, %p264
      %p266 = scmp.ne.s32.totalorder %s252, %s253
      %p267 = scmp.eq.s32.totalorder %s26, 3
      %p268 = por %p266, %p267
      %p270 = scmp.ne.s32.totalorder %s253, %s269
      %p271 = scmp.eq.s32.totalorder %s26, 0
      %p272 = por %p270, %p271
      %s273 = ssub.s32 %s27, %s39
      %p274 = scmp.eq.s32.totalorder %s273, 0
      %s276 = sadd.s32 %s275, 1
      %s277 = scalar_select %p274, %s275, %s276
      %p280 = pneg %p274
      %p281 = scmp.eq.s32.totalorder %s20, 3
      %p282 = por %p280, %p281
      %p283 = scmp.ne.s32.totalorder %s275, %s278
      %p284 = scmp.eq.s32.totalorder %s20, 0
      %p285 = por %p283, %p284
      %p286 = scmp.ne.s32.totalorder %s275, %s278
      %p287 = scmp.eq.s32.totalorder %s25, 3
      %p288 = por %p286, %p287
      %p289 = scmp.ne.s32.totalorder %s278, %s279
      %p290 = scmp.eq.s32.totalorder %s25, 0
      %p291 = por %p289, %p290
      %p292 = scmp.ne.s32.totalorder %s278, %s279
      %p293 = scmp.eq.s32.totalorder %s26, 3
      %p294 = por %p292, %p293
      %p296 = scmp.ne.s32.totalorder %s279, %s295
      %p297 = scmp.eq.s32.totalorder %s26, 0
      %p298 = por %p296, %p297
      %s299 = ssub.s32 %s27, %s39
      %p300 = scmp.eq.s32.totalorder %s299, 0
      %s302 = sadd.s32 %s301, 1
      %s303 = scalar_select %p300, %s301, %s302
      %p306 = pneg %p300
      %p307 = scmp.eq.s32.totalorder %s20, 3
      %p308 = por %p306, %p307
      %p309 = scmp.ne.s32.totalorder %s301, %s304
      %p310 = scmp.eq.s32.totalorder %s20, 0
      %p311 = por %p309, %p310
      %p312 = scmp.ne.s32.totalorder %s301, %s304
      %p313 = scmp.eq.s32.totalorder %s25, 3
      %p314 = por %p312, %p313
      %p315 = scmp.ne.s32.totalorder %s304, %s305
      %p316 = scmp.eq.s32.totalorder %s25, 0
      %p317 = por %p315, %p316
      %p318 = scmp.ne.s32.totalorder %s304, %s305
      %p319 = scmp.eq.s32.totalorder %s26, 3
      %p320 = por %p318, %p319
      %p322 = scmp.ne.s32.totalorder %s305, %s321
      %p323 = scmp.eq.s32.totalorder %s26, 0
      %p324 = por %p322, %p323
      %s325 = smul.u32 %s27, 2
      %s326 = sadd.s32 %s325, %s28
      %s327 = smul.u32 %s39, 2
      %s328 = sadd.s32 %s327, %s35
      %s329 = ssub.s32 %s326, %s328
      %p330 = scmp.eq.s32.totalorder %s329, 0
      %s332 = sadd.s32 %s331, 1
      %s333 = scalar_select %p330, %s331, %s332
      %p336 = pneg %p330
      %p337 = scmp.eq.s32.totalorder %s20, 3
      %p338 = por %p336, %p337
      %p339 = scmp.ne.s32.totalorder %s331, %s334
      %p340 = scmp.eq.s32.totalorder %s20, 0
      %p341 = por %p339, %p340
      %p342 = scmp.ne.s32.totalorder %s331, %s334
      %p343 = scmp.eq.s32.totalorder %s25, 3
      %p344 = por %p342, %p343
      %p345 = scmp.ne.s32.totalorder %s334, %s335
      %p346 = scmp.eq.s32.totalorder %s25, 0
      %p347 = por %p345, %p346
      %p348 = scmp.ne.s32.totalorder %s334, %s335
      %p349 = scmp.eq.s32.totalorder %s26, 3
      %p350 = por %p348, %p349
      %p352 = scmp.ne.s32.totalorder %s335, %s351
      %p353 = scmp.eq.s32.totalorder %s26, 0
      %p354 = por %p352, %p353
      %p355 = scmp.le.s32.totalorder 1, %s20
      %p356 = scmp.lt.s32.totalorder %s20, 5
      %p357 = pnand %p355, %p356
      %p358 = pneg %p357
      // Predicated region
      $region9: #{tpu_custom_call.1} parent=5 // pred_check
        _
      $region10: #{tpu_custom_call.1} parent=5 // pred_check_branch
        %360 = sbr.rel (%p357) target = $region12
      $region11: #{tpu_custom_call.1} parent=5 // pred_region
        %s361 = ssub.s32 %s20, 1
        // Predicated region
        $region13: #{tpu_custom_call.1} parent=11 // pred_check
          %p362 = pneg %p53
        $region14: #{tpu_custom_call.1} parent=11 // pred_check_branch
          %364 = sbr.rel (%p362) target = $region16
        $region15: #{tpu_custom_call.1} parent=11 // pred_region
          _
        $region16: #{tpu_custom_call.1} parent=11 // pred_fallthru
          _
      $region12: #{tpu_custom_call.1} parent=5 // pred_fallthru
        _
      %p365 = scmp.lt.s32.totalorder %s20, 4
      // Predicated region
      $region17: #{tpu_custom_call.1} parent=5 // pred_check
        %p366 = pneg %p365
      $region18: #{tpu_custom_call.1} parent=5 // pred_check_branch
        %368 = sbr.rel (%p366) target = $region20
      $region19: #{tpu_custom_call.1} parent=5 // pred_region
        // Predicated region
        $region21: #{tpu_custom_call.1} parent=19 // pred_check
          %p369 = pneg %p73
        $region22: #{tpu_custom_call.1} parent=19 // pred_check_branch
          %371 = sbr.rel (%p369) target = $region24
        $region23: #{tpu_custom_call.1} parent=19 // pred_region
          %p372 = scmp.lt.s32.totalorder %s28, 1
          %s373 = scalar_select %p372, %s28, 1
          %s374 = smul.addr %s373, 8
          %s375 = scalar_lea.vmem %s1, %s374
        $region24: #{tpu_custom_call.1} parent=19 // pred_fallthru
          _
        // Predicated region
        $region25: #{tpu_custom_call.1} parent=19 // pred_check
          %p376 = pneg %p99
        $region26: #{tpu_custom_call.1} parent=19 // pred_check_branch
          %378 = sbr.rel (%p376) target = $region28
        $region27: #{tpu_custom_call.1} parent=19 // pred_region
          %p379 = scmp.lt.s32.totalorder %s28, 1
          %s380 = scalar_select %p379, %s28, 1
          %s381 = smul.addr %s380, 8
          %s382 = scalar_lea.vmem %s2, %s381
        $region28: #{tpu_custom_call.1} parent=19 // pred_fallthru
          _
        // Predicated region
        $region29: #{tpu_custom_call.1} parent=19 // pred_check
          %p383 = pneg %p125
        $region30: #{tpu_custom_call.1} parent=19 // pred_check_branch
          %385 = sbr.rel (%p383) target = $region32
        $region31: #{tpu_custom_call.1} parent=19 // pred_region
          %p386 = scmp.lt.s32.totalorder %s27, 1
          %s387 = scalar_select %p386, %s27, 1
          %s388 = smul.addr %s387, 2
          %s389 = smul.addr %s388, 8
          %s390 = scalar_lea.vmem %s3, %s389
        $region32: #{tpu_custom_call.1} parent=19 // pred_fallthru
          _
        // Predicated region
        $region33: #{tpu_custom_call.1} parent=19 // pred_check
          %p391 = pneg %p151
        $region34: #{tpu_custom_call.1} parent=19 // pred_check_branch
          %393 = sbr.rel (%p391) target = $region36
        $region35: #{tpu_custom_call.1} parent=19 // pred_region
          %p394 = scmp.lt.s32.totalorder %s27, 1
          %s395 = scalar_select %p394, %s27, 1
          %s396 = scalar_lea.vmem %s4, %s395
        $region36: #{tpu_custom_call.1} parent=19 // pred_fallthru
          _
        // Predicated region
        $region37: #{tpu_custom_call.1} parent=19 // pred_check
          %p397 = pneg %p179
        $region38: #{tpu_custom_call.1} parent=19 // pred_check_branch
          %399 = sbr.rel (%p397) target = $region40
        $region39: #{tpu_custom_call.1} parent=19 // pred_region
          %p400 = scmp.lt.s32.totalorder %s27, 1
          %s401 = scalar_select %p400, %s27, 1
          %p402 = scmp.lt.s32.totalorder %s28, 1
          %s403 = scalar_select %p402, %s28, 1
          %s404 = smul.addr %s401, 2
          %s405 = sadd.s32 %s403, %s404
          %s406 = smul.addr %s405, 8
          %s407 = scalar_lea.vmem %s5, %s406
        $region40: #{tpu_custom_call.1} parent=19 // pred_fallthru
          _
        // Predicated region
        $region41: #{tpu_custom_call.1} parent=19 // pred_check
          %p408 = pneg %p207
        $region42: #{tpu_custom_call.1} parent=19 // pred_check_branch
          %410 = sbr.rel (%p408) target = $region44
        $region43: #{tpu_custom_call.1} parent=19 // pred_region
          %p411 = scmp.lt.s32.totalorder %s27, 1
          %s412 = scalar_select %p411, %s27, 1
          %p413 = scmp.lt.s32.totalorder %s28, 1
          %s414 = scalar_select %p413, %s28, 1
          %s415 = smul.addr %s412, 2
          %s416 = sadd.s32 %s414, %s415
          %s417 = smul.addr %s416, 8
          %s418 = scalar_lea.vmem %s6, %s417
        $region44: #{tpu_custom_call.1} parent=19 // pred_fallthru
          _
        // Predicated region
        $region45: #{tpu_custom_call.1} parent=19 // pred_check
          %p419 = pneg %p233
        $region46: #{tpu_custom_call.1} parent=19 // pred_check_branch
          %421 = sbr.rel (%p419) target = $region48
        $region47: #{tpu_custom_call.1} parent=19 // pred_region
          %p422 = scmp.lt.s32.totalorder %s27, 1
          %s423 = scalar_select %p422, %s27, 1
          %s424 = smul.addr %s423, 4
          %s425 = smul.addr %s424, 4
          %s426 = scalar_lea.vmem %s7, %s425
        $region48: #{tpu_custom_call.1} parent=19 // pred_fallthru
          _
        // Predicated region
        $region49: #{tpu_custom_call.1} parent=19 // pred_check
          %p427 = pneg %p259
        $region50: #{tpu_custom_call.1} parent=19 // pred_check_branch
          %429 = sbr.rel (%p427) target = $region52
        $region51: #{tpu_custom_call.1} parent=19 // pred_region
          %p430 = scmp.lt.s32.totalorder %s27, 1
          %s431 = scalar_select %p430, %s27, 1
          %s432 = smul.addr %s431, 3
          %s433 = smul.addr %s432, 4
          %s434 = scalar_lea.vmem %s8, %s433
        $region52: #{tpu_custom_call.1} parent=19 // pred_fallthru
          _
        // Predicated region
        $region53: #{tpu_custom_call.1} parent=19 // pred_check
          %p435 = pneg %p285
        $region54: #{tpu_custom_call.1} parent=19 // pred_check_branch
          %437 = sbr.rel (%p435) target = $region56
        $region55: #{tpu_custom_call.1} parent=19 // pred_region
          %p438 = scmp.lt.s32.totalorder %s27, 1
          %s439 = scalar_select %p438, %s27, 1
          %s440 = smul.addr %s439, 2
          %s441 = scalar_lea.vmem %s9, %s440
        $region56: #{tpu_custom_call.1} parent=19 // pred_fallthru
          _
        // Predicated region
        $region57: #{tpu_custom_call.1} parent=19 // pred_check
          %p442 = pneg %p311
        $region58: #{tpu_custom_call.1} parent=19 // pred_check_branch
          %444 = sbr.rel (%p442) target = $region60
        $region59: #{tpu_custom_call.1} parent=19 // pred_region
          %p445 = scmp.lt.s32.totalorder %s27, 1
          %s446 = scalar_select %p445, %s27, 1
          %s447 = smul.addr %s446, 2
          %s448 = scalar_lea.vmem %s10, %s447
        $region60: #{tpu_custom_call.1} parent=19 // pred_fallthru
          _
      $region20: #{tpu_custom_call.1} parent=5 // pred_fallthru
        _
      %p449 = scmp.le.s32.totalorder 1, %s20
      %p450 = scmp.lt.s32.totalorder %s20, 5
      %p451 = pnand %p449, %p450
      %p452 = pneg %p451
      // Predicated region
      $region61: #{tpu_custom_call.1} parent=5 // pred_check
        _
      $region62: #{tpu_custom_call.1} parent=5 // pred_check_branch
        %454 = sbr.rel (%p451) target = $region64
      $region63: #{tpu_custom_call.1} parent=5 // pred_region
        %s455 = ssub.s32 %s20, 1
        %p456 = pneg %p53
        %p457 = pneg %p50
        %p458 = scmp.lt.s32.totalorder %s30, 1
        %s459 = scalar_select %p458, %s30, 1
        %s460 = smul.addr %s459, 8
        %s461 = scalar_lea.vmem %s1, %s460
        %p462 = pneg %p79
        %p463 = pneg %p76
        %p464 = scmp.lt.s32.totalorder %s30, 1
        %s465 = scalar_select %p464, %s30, 1
        %s466 = smul.addr %s465, 8
        %s467 = scalar_lea.vmem %s2, %s466
        %p468 = pneg %p105
        %p469 = pneg %p102
        %p470 = scmp.lt.s32.totalorder %s29, 1
        %s471 = scalar_select %p470, %s29, 1
        %s472 = smul.addr %s471, 2
        %s473 = smul.addr %s472, 8
        %s474 = scalar_lea.vmem %s3, %s473
        %p475 = pneg %p131
        %p476 = pneg %p128
        %p477 = scmp.lt.s32.totalorder %s29, 1
        %s478 = scalar_select %p477, %s29, 1
        %s479 = scalar_lea.vmem %s4, %s478
        %p480 = pneg %p157
        %p481 = pneg %p154
        %p482 = scmp.lt.s32.totalorder %s29, 1
        %s483 = scalar_select %p482, %s29, 1
        %p484 = scmp.lt.s32.totalorder %s30, 1
        %s485 = scalar_select %p484, %s30, 1
        %s486 = smul.addr %s483, 2
        %s487 = sadd.s32 %s485, %s486
        %s488 = smul.addr %s487, 8
        %s489 = scalar_lea.vmem %s5, %s488
        %p490 = pneg %p185
        %p491 = pneg %p182
        %p492 = scmp.lt.s32.totalorder %s29, 1
        %s493 = scalar_select %p492, %s29, 1
        %p494 = scmp.lt.s32.totalorder %s30, 1
        %s495 = scalar_select %p494, %s30, 1
        %s496 = smul.addr %s493, 2
        %s497 = sadd.s32 %s495, %s496
        %s498 = smul.addr %s497, 8
        %s499 = scalar_lea.vmem %s6, %s498
        %p500 = pneg %p213
        %p501 = pneg %p210
        %p502 = scmp.lt.s32.totalorder %s29, 1
        %s503 = scalar_select %p502, %s29, 1
        %s504 = smul.addr %s503, 4
        %s505 = smul.addr %s504, 4
        %s506 = scalar_lea.vmem %s7, %s505
        %p507 = pneg %p239
        %p508 = pneg %p236
        %p509 = scmp.lt.s32.totalorder %s29, 1
        %s510 = scalar_select %p509, %s29, 1
        %s511 = smul.addr %s510, 3
        %s512 = smul.addr %s511, 4
        %s513 = scalar_lea.vmem %s8, %s512
        %p514 = pneg %p265
        %p515 = pneg %p262
        %p516 = scmp.lt.s32.totalorder %s29, 1
        %s517 = scalar_select %p516, %s29, 1
        %s518 = smul.addr %s517, 2
        %s519 = scalar_lea.vmem %s9, %s518
        %p520 = pneg %p291
        %p521 = pneg %p288
        %p522 = scmp.lt.s32.totalorder %s29, 1
        %s523 = scalar_select %p522, %s29, 1
        %s524 = smul.addr %s523, 2
        %s525 = scalar_lea.vmem %s10, %s524
        %p526 = pneg %p317
        %p527 = pneg %p314
        %p528 = pneg %p347
        %p529 = pneg %p344
        %s530 = sand.u32 %s334, 1
        %s531 = scalar_lea.sflag [#allocation5], %s530
        %s532 = sand.u32 %s334, 1
        %s533 = smul.addr %s532, 8
        %s534 = scalar_lea.vmem [#allocation4], %s533
        %p535 = scmp.lt.s32.totalorder %s30, 1
        %s536 = scalar_select %p535, %s30, 1
        %s537 = smul.addr %s536, 8
        %s538 = scalar_lea.vmem %s1, %s537
        %p539 = scmp.lt.s32.totalorder %s30, 1
        %s540 = scalar_select %p539, %s30, 1
        %s541 = smul.addr %s540, 8
        %s542 = scalar_lea.vmem %s2, %s541
        %p543 = scmp.lt.s32.totalorder %s29, 1
        %s544 = scalar_select %p543, %s29, 1
        %s545 = smul.addr %s544, 2
        %s546 = smul.addr %s545, 8
        %s547 = scalar_lea.vmem %s3, %s546
        %p548 = scmp.lt.s32.totalorder %s29, 1
        %s549 = scalar_select %p548, %s29, 1
        %s550 = scalar_lea.vmem %s4, %s549
        %p551 = scmp.lt.s32.totalorder %s29, 1
        %s552 = scalar_select %p551, %s29, 1
        %p553 = scmp.lt.s32.totalorder %s30, 1
        %s554 = scalar_select %p553, %s30, 1
        %s555 = smul.addr %s552, 2
        %s556 = sadd.s32 %s554, %s555
        %s557 = smul.addr %s556, 8
        %s558 = scalar_lea.vmem %s5, %s557
        %p559 = scmp.lt.s32.totalorder %s29, 1
        %s560 = scalar_select %p559, %s29, 1
        %p561 = scmp.lt.s32.totalorder %s30, 1
        %s562 = scalar_select %p561, %s30, 1
        %s563 = smul.addr %s560, 2
        %s564 = sadd.s32 %s562, %s563
        %s565 = smul.addr %s564, 8
        %s566 = scalar_lea.vmem %s6, %s565
        %p567 = scmp.lt.s32.totalorder %s29, 1
        %s568 = scalar_select %p567, %s29, 1
        %s569 = smul.addr %s568, 4
        %s570 = smul.addr %s569, 4
        %s571 = scalar_lea.vmem %s7, %s570
        %p572 = scmp.lt.s32.totalorder %s29, 1
        %s573 = scalar_select %p572, %s29, 1
        %s574 = smul.addr %s573, 3
        %s575 = smul.addr %s574, 4
        %s576 = scalar_lea.vmem %s8, %s575
        %p577 = scmp.lt.s32.totalorder %s29, 1
        %s578 = scalar_select %p577, %s29, 1
        %s579 = smul.addr %s578, 2
        %s580 = scalar_lea.vmem %s9, %s579
        %p581 = scmp.lt.s32.totalorder %s29, 1
        %s582 = scalar_select %p581, %s29, 1
        %s583 = smul.addr %s582, 2
        %s584 = scalar_lea.vmem %s10, %s583
        %s585 = smul.u32 %s29, 2
        %s586 = sadd.s32 %s585, %s30
        %p588 = scmp.eq.s32.totalorder %s30, 0
        // Predicated region
        $region65: #{tpu_custom_call.1} parent=63 // pred_check
          %p589 = pneg %p588
        $region66: #{tpu_custom_call.1} parent=63 // pred_check_branch
          %591 = sbr.rel (%p589) target = $region68
        $region67: #{tpu_custom_call.1} parent=63 // pred_region
          %v592 = vld [vmem:[%s547] sm:$0xff]
          %v593 = vld [vmem:[%s547 + $0x8] sm:$0xff]
          %v594 = vxor.u32 %v592, 2147483648
          %v595 = vxor.u32 %v593, 2147483648
          %v596 = vmul.f32 %v594, 1.442695
          %v597 = vpow.pop %v596
          %v598 = vmul.f32 %v595, 1.442695
          %v599 = vpow.pop %v598
          %v600 = vadd.f32 %v597, 1.0
          %v601 = vadd.f32 %v599, 1.0
          %v602 = vrcp.pop %v600
          %v603 = vmul.f32 1.0, %v602
          %v604 = vrcp.pop %v601
          %v605 = vmul.f32 1.0, %v604
          %v606 = vld [vmem:[%s0] sm:$0xff]
          %v607 = vld [vmem:[%s0 + $0x8] sm:$0xff]
          %609 = vset.pattern.permute.xlu0 0
          %610 = vperm.xlu0 %609, %v603
          %v611 = vpop.permute.xlu0 %610
          %614 = vset.pattern.permute.xlu0 0
          %615 = vperm.xlu0 %614, %v605
          %v616 = vpop.permute.xlu0 %615
          %v618 = vmul.f32 %v611, %v606
          %v619 = vmul.f32 %v616, %v607
          %v620 = vpack.c.bf16 %v619, %v618
          %v621 = vld [vmem:[%s571] sm:$0xf]
          %v622 = vld [vmem:[%s571 + $0x4] sm:$0xf]
          %v623 = vld [vmem:[%s571 + $0x8] sm:$0xf]
          %v624 = vld [vmem:[%s571 + $0xc] sm:$0xf]
          %v629 = vunpack.c.l.b16 %v621
          %v630 = vunpack.c.l.b16 %v622
          %v631 = vunpack.c.l.b16 %v623
          %v632 = vunpack.c.l.b16 %v624
          %v633 = vpack.c.b16 %v630, %v629
          %v634 = vpack.c.b16 %v632, %v631
          %vm637 = vcmask 261120
          %v639 = vsel %vm637, %v620, 0
          %641 = vmatprep.subr.bf16.mxu0 0
          %642 = vmatpush1.bf16.msra.mxu0 %v633
          %643 = vmatprep.subr.bf16.mxu0 0
          %644 = vmatpush1.bf16.msra.mxu0 %v634
          %645 = vmatprep.subr.bf16.mxu0 0
          %646 = vmatpush1.bf16.msra.mxu0 0
          %647 = vmatprep.subr.bf16.mxu0 0
          %648 = vmatpush1.bf16.msra.mxu0 0
          %649 = vmatprep.subr.bf16.mxu0 0
          %650 = vmatpush1.bf16.msra.mxu0 0
          %651 = vmatprep.subr.bf16.mxu0 0
          %652 = vmatpush1.bf16.msra.mxu0 0
          %653 = vmatprep.subr.bf16.mxu0 0
          %654 = vmatpush1.bf16.msra.mxu0 0
          %655 = vmatprep.subr.bf16.mxu0 0
          %656 = vmatpush1.bf16.msra.mxu0 0
          %657 = vmatprep.subr.bf16.mxu0 0
          %658 = vmatpush1.bf16.msra.mxu0 0
          %659 = vmatprep.subr.bf16.mxu0 0
          %660 = vmatpush1.bf16.msra.mxu0 0
          %661 = vmatprep.subr.bf16.mxu0 0
          %662 = vmatpush1.bf16.msra.mxu0 0
          %663 = vmatprep.subr.bf16.mxu0 0
          %664 = vmatpush1.bf16.msra.mxu0 0
          %665 = vmatprep.subr.bf16.mxu0 0
          %666 = vmatpush1.bf16.msra.mxu0 0
          %667 = vmatprep.subr.bf16.mxu0 0
          %668 = vmatpush1.bf16.msra.mxu0 0
          %669 = vmatprep.subr.bf16.mxu0 0
          %670 = vmatpush1.bf16.msra.mxu0 0
          %671 = vmatprep.subr.bf16.mxu0 0
          %672 = vmatpush1.bf16.msra.mxu0 0
          %673 = vmatprep.mubr.bf16.mxu0 0
          %674 = vmatmul.mubr.bf16.gmra.mrb[0].mxu0 %v639
          %v675 = vpop.f32.mrb[0].mxu0
          %v676 = vadd.f32 0.0, %v675
          %v677 = vpop.f32.mrb[0].mxu0
          %v678 = vpop.f32.mrb[0].mxu0
          %v679 = vadd.f32 0.0, %v678
          %v680 = vpop.f32.mrb[0].mxu0
          %681 = vdwg.mxu0
          %vm682 = vcmask 130048
          %683 = vst.msk [vmem:[#allocation2] sm:$0xff] %vm682, %v676
          %684 = vst.msk [vmem:[#allocation2 + $0x8] sm:$0xff] %vm682, %v679
          %v685 = vld [vmem:[%s580] sm:$0x3]
          %v687 = vsel %vm682, %v685, 0
          %v690 = vsel %vm682, %v676, 0
          %v693 = vsel %vm682, %v679, 0
          %695 = vmatprep.subr.mxu0 0.0
          %696 = vmatpush1.xpose.msra.mxu0 %v690
          %697 = vmatprep.subr.mxu0 0.0
          %698 = vmatpush1.xpose.msra.mxu0 %v693
          %699 = vmatprep.subr.mxu0 0.0
          %700 = vmatpush1.xpose.msra.mxu0 0.0
          %701 = vmatprep.subr.mxu0 0.0
          %702 = vmatpush1.xpose.msra.mxu0 0.0
          %703 = vmatprep.subr.mxu0 0.0
          %704 = vmatpush1.xpose.msra.mxu0 0.0
          %705 = vmatprep.subr.mxu0 0.0
          %706 = vmatpush1.xpose.msra.mxu0 0.0
          %707 = vmatprep.subr.mxu0 0.0
          %708 = vmatpush1.xpose.msra.mxu0 0.0
          %709 = vmatprep.subr.mxu0 0.0
          %710 = vmatpush1.xpose.msra.mxu0 0.0
          %711 = vmatprep.subr.mxu0 0.0
          %712 = vmatpush1.xpose.msra.mxu0 0.0
          %713 = vmatprep.subr.mxu0 0.0
          %714 = vmatpush1.xpose.msra.mxu0 0.0
          %715 = vmatprep.subr.mxu0 0.0
          %716 = vmatpush1.xpose.msra.mxu0 0.0
          %717 = vmatprep.subr.mxu0 0.0
          %718 = vmatpush1.xpose.msra.mxu0 0.0
          %719 = vmatprep.subr.mxu0 0.0
          %720 = vmatpush1.xpose.msra.mxu0 0.0
          %721 = vmatprep.subr.mxu0 0.0
          %722 = vmatpush1.xpose.msra.mxu0 0.0
          %723 = vmatprep.subr.mxu0 0.0
          %724 = vmatpush1.xpose.msra.mxu0 0.0
          %725 = vmatprep.subr.mxu0 0.0
          %726 = vmatpush1.xpose.msra.mxu0 0.0
          %727 = vmatprep.subr.mxu0 0.0
          %728 = vmatpush1.xpose.msra.mxu0 0.0
          %729 = vmatprep.subr.mxu0 0.0
          %730 = vmatpush1.xpose.msra.mxu0 0.0
          %731 = vmatprep.subr.mxu0 0.0
          %732 = vmatpush1.xpose.msra.mxu0 0.0
          %733 = vmatprep.subr.mxu0 0.0
          %734 = vmatpush1.xpose.msra.mxu0 0.0
          %735 = vmatprep.subr.mxu0 0.0
          %736 = vmatpush1.xpose.msra.mxu0 0.0
          %737 = vmatprep.subr.mxu0 0.0
          %738 = vmatpush1.xpose.msra.mxu0 0.0
          %739 = vmatprep.subr.mxu0 0.0
          %740 = vmatpush1.xpose.msra.mxu0 0.0
          %741 = vmatprep.subr.mxu0 0.0
          %742 = vmatpush1.xpose.msra.mxu0 0.0
          %743 = vmatprep.subr.mxu0 0.0
          %744 = vmatpush1.xpose.msra.mxu0 0.0
          %745 = vmatprep.subr.mxu0 0.0
          %746 = vmatpush1.xpose.msra.mxu0 0.0
          %747 = vmatprep.subr.mxu0 0.0
          %748 = vmatpush1.xpose.msra.mxu0 0.0
          %749 = vmatprep.subr.mxu0 0.0
          %750 = vmatpush1.xpose.msra.mxu0 0.0
          %751 = vmatprep.subr.mxu0 0.0
          %752 = vmatpush1.xpose.msra.mxu0 0.0
          %753 = vmatprep.subr.mxu0 0.0
          %754 = vmatpush1.xpose.msra.mxu0 0.0
          %755 = vmatprep.subr.mxu0 0.0
          %756 = vmatpush1.xpose.msra.mxu0 0.0
          %757 = vmatprep.subr.mxu0 0.0
          %758 = vmatpush1.xpose.msra.mxu0 0.0
          %759 = vmatprep.mubr.f32.mxu0 0.0
          %760 = vmatmul.mubr.f32.gmra.mrb[0].mxu0 %v687
          %v761 = vpop.f32.mrb[0].mxu0
          %v762 = vadd.f32 0.0, %v761
          %v763 = vpop.f32.mrb[0].mxu0
          %764 = vdwg.mxu0
          %vm765 = vcmask 123904
          %766 = vst.msk [vmem:[#allocation3] sm:$0x3] %vm765, %v762
        $region68: #{tpu_custom_call.1} parent=63 // pred_fallthru
          _
        %v767 = vld [vmem:[%s558] sm:$0xff]
        %v768 = vxor.u32 %v767, 2147483648
        %v769 = vmul.f32 %v768, 1.442695
        %v770 = vpow.pop %v769
        %v771 = vadd.f32 %v770, 1.0
        %v772 = vrcp.pop %v771
        %v773 = vmul.f32 1.0, %v772
        %v774 = vld [vmem:[%s538] sm:$0xff]
        %776 = vset.pattern.permute.xlu0 0
        %777 = vperm.xlu0 %776, %v773
        %v778 = vpop.permute.xlu0 %777
        %v780 = vmul.f32 %v778, %v774
        %v781 = vpack.c.bf16 %v780, %v780
        %v782 = vld [vmem:[%s576] sm:$0xf]
        %v783 = vld [vmem:[%s576 + $0x4] sm:$0xf]
        %v784 = vld [vmem:[%s576 + $0x8] sm:$0xf]
        %v788 = vunpack.c.l.b16 %v782
        %v789 = vunpack.c.l.b16 %v783
        %v790 = vunpack.c.l.b16 %v784
        %v791 = vpack.c.b16 %v789, %v788
        %v792 = vpack.c.b16 %v790, %v790
        %vm794 = vcmask 195584
        %v796 = vsel %vm794, %v781, 0
        %vm798 = vcmask 1043456
        %v800 = vsel %vm798, %v792, 0
        %802 = vmatprep.subr.bf16.mxu0 0
        %803 = vmatpush1.bf16.msra.mxu0 %v791
        %804 = vmatprep.subr.bf16.mxu0 0
        %805 = vmatpush1.bf16.msra.mxu0 %v800
        %806 = vmatprep.subr.bf16.mxu0 0
        %807 = vmatpush1.bf16.msra.mxu0 0
        %808 = vmatprep.subr.bf16.mxu0 0
        %809 = vmatpush1.bf16.msra.mxu0 0
        %810 = vmatprep.subr.bf16.mxu0 0
        %811 = vmatpush1.bf16.msra.mxu0 0
        %812 = vmatprep.subr.bf16.mxu0 0
        %813 = vmatpush1.bf16.msra.mxu0 0
        %814 = vmatprep.subr.bf16.mxu0 0
        %815 = vmatpush1.bf16.msra.mxu0 0
        %816 = vmatprep.subr.bf16.mxu0 0
        %817 = vmatpush1.bf16.msra.mxu0 0
        %818 = vmatprep.subr.bf16.mxu0 0
        %819 = vmatpush1.bf16.msra.mxu0 0
        %820 = vmatprep.subr.bf16.mxu0 0
        %821 = vmatpush1.bf16.msra.mxu0 0
        %822 = vmatprep.subr.bf16.mxu0 0
        %823 = vmatpush1.bf16.msra.mxu0 0
        %824 = vmatprep.subr.bf16.mxu0 0
        %825 = vmatpush1.bf16.msra.mxu0 0
        %826 = vmatprep.subr.bf16.mxu0 0
        %827 = vmatpush1.bf16.msra.mxu0 0
        %828 = vmatprep.subr.bf16.mxu0 0
        %829 = vmatpush1.bf16.msra.mxu0 0
        %830 = vmatprep.subr.bf16.mxu0 0
        %831 = vmatpush1.bf16.msra.mxu0 0
        %832 = vmatprep.subr.bf16.mxu0 0
        %833 = vmatpush1.bf16.msra.mxu0 0
        %834 = vmatprep.mubr.bf16.mxu0 0
        %835 = vmatmul.mubr.bf16.gmra.mrb[0].mxu0 %v796
        %v836 = vpop.f32.mrb[0].mxu0
        %v837 = vadd.f32 0.0, %v836
        %v838 = vpop.f32.mrb[0].mxu0
        %v839 = vpop.f32.mrb[0].mxu0
        %v840 = vpop.f32.mrb[0].mxu0
        %841 = vdwg.mxu0
        %v842 = vld [vmem:[%s584] sm:$0x3]
        %vm843 = vcmask 130048
        %v845 = vsel %vm843, %v837, 0
        %v848 = vsel %vm843, %v842, 0
        %850 = vmatprep.subr.mxu0 0.0
        %851 = vmatpush1.xpose.msra.mxu0 %v848
        %852 = vmatprep.subr.mxu0 0.0
        %853 = vmatpush1.xpose.msra.mxu0 0.0
        %854 = vmatprep.subr.mxu0 0.0
        %855 = vmatpush1.xpose.msra.mxu0 0.0
        %856 = vmatprep.subr.mxu0 0.0
        %857 = vmatpush1.xpose.msra.mxu0 0.0
        %858 = vmatprep.subr.mxu0 0.0
        %859 = vmatpush1.xpose.msra.mxu0 0.0
        %860 = vmatprep.subr.mxu0 0.0
        %861 = vmatpush1.xpose.msra.mxu0 0.0
        %862 = vmatprep.subr.mxu0 0.0
        %863 = vmatpush1.xpose.msra.mxu0 0.0
        %864 = vmatprep.subr.mxu0 0.0
        %865 = vmatpush1.xpose.msra.mxu0 0.0
        %866 = vmatprep.subr.mxu0 0.0
        %867 = vmatpush1.xpose.msra.mxu0 0.0
        %868 = vmatprep.subr.mxu0 0.0
        %869 = vmatpush1.xpose.msra.mxu0 0.0
        %870 = vmatprep.subr.mxu0 0.0
        %871 = vmatpush1.xpose.msra.mxu0 0.0
        %872 = vmatprep.subr.mxu0 0.0
        %873 = vmatpush1.xpose.msra.mxu0 0.0
        %874 = vmatprep.subr.mxu0 0.0
        %875 = vmatpush1.xpose.msra.mxu0 0.0
        %876 = vmatprep.subr.mxu0 0.0
        %877 = vmatpush1.xpose.msra.mxu0 0.0
        %878 = vmatprep.subr.mxu0 0.0
        %879 = vmatpush1.xpose.msra.mxu0 0.0
        %880 = vmatprep.subr.mxu0 0.0
        %881 = vmatpush1.xpose.msra.mxu0 0.0
        %882 = vmatprep.subr.mxu0 0.0
        %883 = vmatpush1.xpose.msra.mxu0 0.0
        %884 = vmatprep.subr.mxu0 0.0
        %885 = vmatpush1.xpose.msra.mxu0 0.0
        %886 = vmatprep.subr.mxu0 0.0
        %887 = vmatpush1.xpose.msra.mxu0 0.0
        %888 = vmatprep.subr.mxu0 0.0
        %889 = vmatpush1.xpose.msra.mxu0 0.0
        %890 = vmatprep.subr.mxu0 0.0
        %891 = vmatpush1.xpose.msra.mxu0 0.0
        %892 = vmatprep.subr.mxu0 0.0
        %893 = vmatpush1.xpose.msra.mxu0 0.0
        %894 = vmatprep.subr.mxu0 0.0
        %895 = vmatpush1.xpose.msra.mxu0 0.0
        %896 = vmatprep.subr.mxu0 0.0
        %897 = vmatpush1.xpose.msra.mxu0 0.0
        %898 = vmatprep.subr.mxu0 0.0
        %899 = vmatpush1.xpose.msra.mxu0 0.0
        %900 = vmatprep.subr.mxu0 0.0
        %901 = vmatpush1.xpose.msra.mxu0 0.0
        %902 = vmatprep.subr.mxu0 0.0
        %903 = vmatpush1.xpose.msra.mxu0 0.0
        %904 = vmatprep.subr.mxu0 0.0
        %905 = vmatpush1.xpose.msra.mxu0 0.0
        %906 = vmatprep.subr.mxu0 0.0
        %907 = vmatpush1.xpose.msra.mxu0 0.0
        %908 = vmatprep.subr.mxu0 0.0
        %909 = vmatpush1.xpose.msra.mxu0 0.0
        %910 = vmatprep.subr.mxu0 0.0
        %911 = vmatpush1.xpose.msra.mxu0 0.0
        %912 = vmatprep.subr.mxu0 0.0
        %913 = vmatpush1.xpose.msra.mxu0 0.0
        %914 = vmatprep.mubr.f32.mxu0 0.0
        %915 = vmatmul.mubr.f32.gmra.mrb[0].mxu0 %v845
        %v916 = vpop.f32.mrb[0].mxu0
        %v917 = vadd.f32 0.0, %v916
        %v918 = vpop.f32.mrb[0].mxu0
        %919 = vdwg.mxu0
        %v920 = vld [vmem:[%s542] sm:$0xff]
        %vm921 = vcmp.gt.f32.partialorder %v920, 0.0
        %v922 = vld [vmem:[%s550] sm:$0x1]
        %v923 = vld [vmem:[%s566] sm:$0xff]
        %v925 = vlaneseq
        %v926 = vshrl.u32 %v925, 7
        %v927 = vsub.s32 0, %v926
        %v928 = vrot.slane %v922, %v927
        %931 = vset.pattern.permute.xlu0 0
        %932 = vperm.xlu0 %931, %v923
        %v933 = vpop.permute.xlu0 %932
        %vm935 = vcmp.ge.f32.partialorder %v928, %v933
        %vm936 = vmand %vm921, %vm935
        %v937 = vsel %vm936, 0.0, -1e+30
        %v938 = vld [vmem:[#allocation2] sm:$0xff]
        %v939 = vld [vmem:[#allocation2 + $0x8] sm:$0xff]
        %v940 = vld [vmem:[#allocation3] sm:$0x3]
        %941 = vst [vmem:[%s534] sm:$0xff] 0.0
        %943 = vset.pattern.permute.xlu0 0
        %944 = vperm.xlu0 %943, %v917
        %v945 = vpop.permute.xlu0 %944
        %v947 = vlaneseq
        %v948 = vshrl.u32 %v947, 7
        %v949 = vsub.s32 0, %v948
        %v950 = vrot.slane %v940, %v949
        %v951 = vadd.f32 %v945, %v950
        %vm952 = vcmp.ge.f32.partialorder %v951, 0.0
        %v953 = vmul.f32 %v951, 0.2
        %v954 = vsel %vm952, %v951, %v953
        %v955 = vadd.f32 %v954, %v937
        %v956 = vsel %vm843, %v955, -inf
        %957 = vmax.xlane.f32.xlu0 %v956
        %v958 = vpop.xlane.xlu0 %957
        %v959 = vsub.f32 %v955, %v958
        %v960 = vmul.f32 %v959, 1.442695
        %v961 = vpow.pop %v960
        %v962 = vsel %vm843, %v961, 0.0
        %963 = vadd.xlane.f32.xlu0 %v962
        %v964 = vpop.xlane.xlu0 %963
        %v965 = vpack.c.bf16 %v961, %v961
        %v966 = vpack.c.bf16 %v939, %v938
        %v968 = vsel %vm843, %v965, 0
        %970 = vmatprep.subr.bf16.mxu0 0
        %971 = vmatpush1.bf16.msra.mxu0 %v966
        %972 = vmatprep.subr.bf16.mxu0 0
        %973 = vmatpush1.bf16.msra.mxu0 0
        %974 = vmatprep.subr.bf16.mxu0 0
        %975 = vmatpush1.bf16.msra.mxu0 0
        %976 = vmatprep.subr.bf16.mxu0 0
        %977 = vmatpush1.bf16.msra.mxu0 0
        %978 = vmatprep.subr.bf16.mxu0 0
        %979 = vmatpush1.bf16.msra.mxu0 0
        %980 = vmatprep.subr.bf16.mxu0 0
        %981 = vmatpush1.bf16.msra.mxu0 0
        %982 = vmatprep.subr.bf16.mxu0 0
        %983 = vmatpush1.bf16.msra.mxu0 0
        %984 = vmatprep.subr.bf16.mxu0 0
        %985 = vmatpush1.bf16.msra.mxu0 0
        %986 = vmatprep.subr.bf16.mxu0 0
        %987 = vmatpush1.bf16.msra.mxu0 0
        %988 = vmatprep.subr.bf16.mxu0 0
        %989 = vmatpush1.bf16.msra.mxu0 0
        %990 = vmatprep.subr.bf16.mxu0 0
        %991 = vmatpush1.bf16.msra.mxu0 0
        %992 = vmatprep.subr.bf16.mxu0 0
        %993 = vmatpush1.bf16.msra.mxu0 0
        %994 = vmatprep.subr.bf16.mxu0 0
        %995 = vmatpush1.bf16.msra.mxu0 0
        %996 = vmatprep.subr.bf16.mxu0 0
        %997 = vmatpush1.bf16.msra.mxu0 0
        %998 = vmatprep.subr.bf16.mxu0 0
        %999 = vmatpush1.bf16.msra.mxu0 0
        %1000 = vmatprep.subr.bf16.mxu0 0
        %1001 = vmatpush1.bf16.msra.mxu0 0
        %1002 = vmatprep.mubr.bf16.mxu0 0
        %1003 = vmatmul.mubr.bf16.gmra.mrb[0].mxu0 %v968
        %v1004 = vpop.f32.mrb[0].mxu0
        %v1005 = vadd.f32 0.0, %v1004
        %v1006 = vpop.f32.mrb[0].mxu0
        %v1007 = vpop.f32.mrb[0].mxu0
        %v1008 = vpop.f32.mrb[0].mxu0
        %1009 = vdwg.mxu0
        %v1010 = vrcp.pop %v964
        %v1011 = vmul.f32 %v1005, %v1010
        %vm1012 = vcmp.gt.f32.partialorder %v1011, 0.0
        %v1013 = vmin.f32 %v1011, 0.0
        %v1014 = vmul.f32 %v1013, 1.442695
        %v1015 = vpow.pop %v1014
        %v1016 = vsub.f32 %v1015, 1.0
        %v1017 = vsel %vm1012, %v1011, %v1016
        %vm1018 = vcmask 64512
        %1019 = vst.msk [vmem:[%s534] sm:$0xff] %vm1018, %v1017
        %1020 = vset.pattern.permute.xlu0 1
        %1021 = vperm.xlu0 %1020, %v917
        %v1022 = vpop.permute.xlu0 %1021
        %v1024 = vlaneseq
        %v1025 = vshrl.u32 %v1024, 7
        %v1026 = vsub.s32 1, %v1025
        %v1027 = vrot.slane %v940, %v1026
        %v1028 = vadd.f32 %v1022, %v1027
        %vm1029 = vcmp.ge.f32.partialorder %v1028, 0.0
        %v1030 = vmul.f32 %v1028, 0.2
        %v1031 = vsel %vm1029, %v1028, %v1030
        %v1032 = vadd.f32 %v1031, %v937
        %v1033 = vsel %vm843, %v1032, -inf
        %1034 = vmax.xlane.f32.xlu0 %v1033
        %v1035 = vpop.xlane.xlu0 %1034
        %v1036 = vsub.f32 %v1032, %v1035
        %v1037 = vmul.f32 %v1036, 1.442695
        %v1038 = vpow.pop %v1037
        %v1039 = vsel %vm843, %v1038, 0.0
        %1040 = vadd.xlane.f32.xlu0 %v1039
        %v1041 = vpop.xlane.xlu0 %1040
        %v1042 = vpack.c.bf16 %v1038, %v1038
        %1044 = vrot.lane.b32.xlu0 %v966, 120
        %v1045 = vpop.permute.xlu0 %1044
        %v1048 = vsel %vm843, %v1042, 0
        %1050 = vmatprep.subr.bf16.mxu0 0
        %1051 = vmatpush1.bf16.msra.mxu0 %v1045
        %1052 = vmatprep.subr.bf16.mxu0 0
        %1053 = vmatpush1.bf16.msra.mxu0 0
        %1054 = vmatprep.subr.bf16.mxu0 0
        %1055 = vmatpush1.bf16.msra.mxu0 0
        %1056 = vmatprep.subr.bf16.mxu0 0
        %1057 = vmatpush1.bf16.msra.mxu0 0
        %1058 = vmatprep.subr.bf16.mxu0 0
        %1059 = vmatpush1.bf16.msra.mxu0 0
        %1060 = vmatprep.subr.bf16.mxu0 0
        %1061 = vmatpush1.bf16.msra.mxu0 0
        %1062 = vmatprep.subr.bf16.mxu0 0
        %1063 = vmatpush1.bf16.msra.mxu0 0
        %1064 = vmatprep.subr.bf16.mxu0 0
        %1065 = vmatpush1.bf16.msra.mxu0 0
        %1066 = vmatprep.subr.bf16.mxu0 0
        %1067 = vmatpush1.bf16.msra.mxu0 0
        %1068 = vmatprep.subr.bf16.mxu0 0
        %1069 = vmatpush1.bf16.msra.mxu0 0
        %1070 = vmatprep.subr.bf16.mxu0 0
        %1071 = vmatpush1.bf16.msra.mxu0 0
        %1072 = vmatprep.subr.bf16.mxu0 0
        %1073 = vmatpush1.bf16.msra.mxu0 0
        %1074 = vmatprep.subr.bf16.mxu0 0
        %1075 = vmatpush1.bf16.msra.mxu0 0
        %1076 = vmatprep.subr.bf16.mxu0 0
        %1077 = vmatpush1.bf16.msra.mxu0 0
        %1078 = vmatprep.subr.bf16.mxu0 0
        %1079 = vmatpush1.bf16.msra.mxu0 0
        %1080 = vmatprep.subr.bf16.mxu0 0
        %1081 = vmatpush1.bf16.msra.mxu0 0
        %1082 = vmatprep.mubr.bf16.mxu0 0
        %1083 = vmatmul.mubr.bf16.gmra.mrb[0].mxu0 %v1048
        %v1084 = vpop.f32.mrb[0].mxu0
        %v1085 = vadd.f32 0.0, %v1084
        %v1086 = vpop.f32.mrb[0].mxu0
        %v1087 = vpop.f32.mrb[0].mxu0
        %v1088 = vpop.f32.mrb[0].mxu0
        %1089 = vdwg.mxu0
        %v1090 = vrcp.pop %v1041
        %v1091 = vmul.f32 %v1085, %v1090
        %vm1092 = vcmp.gt.f32.partialorder %v1091, 0.0
        %v1093 = vmin.f32 %v1091, 0.0
        %v1094 = vmul.f32 %v1093, 1.442695
        %v1095 = vpow.pop %v1094
        %v1096 = vsub.f32 %v1095, 1.0
        %v1097 = vsel %vm1092, %v1091, %v1096
        %1099 = vrot.lane.b32.xlu0 %v1097, 8
        %v1100 = vpop.permute.xlu0 %1099
        %vm1102 = vcmask 130112
        %1103 = vst.msk [vmem:[%s534] sm:$0xff] %vm1102, %v1100
        %s1104 = sand.u32 %s334, 1
        %s1105 = scalar_lea.sflag [#allocation5], %s1104
        %s1106 = sand.u32 %s334, 1
        %s1107 = smul.addr %s1106, 8
        %s1108 = scalar_lea.vmem [#allocation4], %s1107
        // Predicated region
        $region69: #{tpu_custom_call.1} parent=63 // pred_check
          %p1109 = pneg %p344
        $region70: #{tpu_custom_call.1} parent=63 // pred_check_branch
          %1111 = sbr.rel (%p1109) target = $region72
        $region71: #{tpu_custom_call.1} parent=63 // pred_region
          %s1112 = smul.u32 %s29, 2
          %s1113 = sadd.s32 %s1112, %s30
          %s1115 = ssub.s32 128, 128
          %1116 = vsyncadd %s1105, %s1115
          %s1117 = smul.addr %s1113, 128
          %s1118 = scalar_lea.hbm %s11, %s1117
          %s1120 = sshll.u32 %s1108, 4
          %s1121 = int_to_ptr.vmem [resolvable:$true] %s1120
          %1123 = dma.vmem_to_hbm [thread:$0]  %s1121, 128, %s1118, %s1105
        $region72: #{tpu_custom_call.1} parent=63 // pred_fallthru
          _
      $region64: #{tpu_custom_call.1} parent=5 // pred_fallthru
        _
      %p1124 = scmp.le.s32.totalorder 2, %s20
      // Predicated region
      $region73: #{tpu_custom_call.1} parent=5 // pred_check
        %p1125 = pneg %p1124
      $region74: #{tpu_custom_call.1} parent=5 // pred_check_branch
        %1127 = sbr.rel (%p1125) target = $region76
      $region75: #{tpu_custom_call.1} parent=5 // pred_region
        %s1128 = ssub.s32 %s20, 2
        // Predicated region
        $region77: #{tpu_custom_call.1} parent=75 // pred_check
          %p1129 = pneg %p350
        $region78: #{tpu_custom_call.1} parent=75 // pred_check_branch
          %1131 = sbr.rel (%p1129) target = $region80
        $region79: #{tpu_custom_call.1} parent=75 // pred_region
          %s1132 = sand.u32 %s335, 1
          %s1133 = scalar_lea.sflag [#allocation5], %s1132
          %s1134 = sand.u32 %s335, 1
          %s1135 = smul.addr %s1134, 8
          %s1136 = scalar_lea.vmem [#allocation4], %s1135
          %1137 = dma.done %s1133, 128
        $region80: #{tpu_custom_call.1} parent=75 // pred_fallthru
          _
      $region76: #{tpu_custom_call.1} parent=5 // pred_fallthru
        _
    $region6: #{tpu_custom_call.1} parent=1 // loop_footer
      %s24 = sadd.s32 1, %s20
    $region7: #{tpu_custom_call.1} parent=1 // loop_footer_branch
      %19 = sbr.rel target = $region3
    $region8: #{tpu_custom_call.1} parent=1 // loop_exit
      _
    %1138 = vsyncpa [#allocation5], 1
    %s1139 = scalar_lea.sflag [#allocation5], 1
    %1140 = vsyncpa %s1139, 1

</llo_original>
